<compile_context>
chip_gen: v5e
topology: v5e:2x2
jax: 0.10.0
libtpu: 0.0.40
codegen_flags: <defaults>
</compile_context>

<pallas_src>
import math

import jax
import jax.numpy as jnp
from jax.experimental import pallas as pl
from jax.experimental.pallas import tpu as pltpu


def _nonorm_loss_kernel(rowscale_ref, diagy_ref, wneg_ref, y_kj_ref, y_ij_ref,
                        grads_ref):
    j = pl.program_id(1)
    k = pl.program_id(2)
    nk = pl.num_programs(2)
    tn = grads_ref.shape[1]

    @pl.when(k == 0)
    def _():
        grads_ref[...] = jnp.zeros_like(grads_ref)

    # acc += (-(W + W.T))[i-block, k-block] @ Y[k-block, j-block]
    grads_ref[...] += jnp.dot(wneg_ref[...], y_kj_ref[...],
                              preferred_element_type=jnp.float32)

    @pl.when(k == nk - 1)
    def _():
        # Diagonal corrections, applied once per (i, j) tile in f32:
        #   grads += Y_ij * (rowscale[rows, None] + diag(Y)[None, cols])
        col_start = pl.multiple_of(j * tn, 128)
        diag_y = diagy_ref[:, pl.ds(col_start, tn)]          # (1, tn)  f32
        grads_ref[...] += y_ij_ref[...] * (rowscale_ref[...] + diag_y)


def nonorm_loss(Y, W, *, tm=512, tn=512, tk=512,
                matmul_dtype=jnp.bfloat16,
                vmem_limit_bytes=48 * 1024 * 1024):
    """Pallas implementation of NoNormLoss.forward.  Y: [N, N], W: [N, N]."""
    N = W.shape[0]
    assert Y.shape == (N, N), "kernel assumes square Y (required for grads shape)"
    # tn/tk are lane dims of blocks -> multiples of 128; tm multiple of 8
    # (use >=128 for MXU efficiency).
    assert tm % 8 == 0 and tn % 128 == 0 and tk % 128 == 0

    Wf = W.astype(jnp.float32)
    Yf = Y.astype(jnp.float32)

    # Zero-pad to tile multiples.  Padding is exact: padded rows/cols of W and
    # Y are zero, so the padded region of grads is identically zero and the
    # loss sum is unchanged.  (Keep tm=tn=tk equal to avoid lcm blow-up.)
    lcm = math.lcm(tm, tn, tk)
    Np = -(-N // lcm) * lcm
    pad = Np - N
    if pad:
        Wf = jnp.pad(Wf, ((0, pad), (0, pad)))
        Yf = jnp.pad(Yf, ((0, pad), (0, pad)))

    # Hoisted O(N^2) work (one XLA pass each).
    diag_w = jnp.diagonal(Wf)
    deg = jnp.sum(Wf, axis=0) - diag_w                       # col sums, diag zeroed
    rowscale = (2.0 * (deg + diag_w)).reshape(Np, 1)         # f32 column vector
    diag_y = jnp.diagonal(Yf).reshape(1, Np)                 # f32 lane-dense row
    w_neg = (-(Wf + Wf.T)).astype(matmul_dtype)              # streamed once
    y_rhs = Yf.astype(matmul_dtype)                          # matmul RHS stream

    gi, gj, gk = Np // tm, Np // tn, Np // tk

    grads_p = pl.pallas_call(
        _nonorm_loss_kernel,
        out_shape=jax.ShapeDtypeStruct((Np, Np), jnp.float32),
        grid_spec=pltpu.PrefetchScalarGridSpec(
            num_scalar_prefetch=0,
            grid=(gi, gj, gk),
            in_specs=[
                pl.BlockSpec((tm, 1), lambda i, j, k: (i, 0)),    # rowscale col
                pl.BlockSpec((1, Np), lambda i, j, k: (0, 0)),    # diag(Y), resident
                pl.BlockSpec((tm, tk), lambda i, j, k: (i, k)),   # Wneg block
                pl.BlockSpec((tk, tn), lambda i, j, k: (k, j)),   # Y block (matmul RHS)
                pl.BlockSpec((tm, tn), lambda i, j, k: (i, j)),   # Y block (diag terms, f32)
            ],
            out_specs=pl.BlockSpec((tm, tn), lambda i, j, k: (i, j)),  # grads / accumulator
        ),
        compiler_params=pltpu.CompilerParams(
            dimension_semantics=("parallel", "parallel", "arbitrary"),
            vmem_limit_bytes=vmem_limit_bytes,
        ),
        cost_estimate=pl.CostEstimate(
            flops=2 * Np * Np * Np + 3 * Np * Np,
            bytes_accessed=(jnp.dtype(matmul_dtype).itemsize * Np * Np * (gi + gj)
                            + 4 * Np * Np * 2),
            transcendentals=0,
        ),
    )(rowscale, diag_y, w_neg, y_rhs, Yf)

    grads = grads_p[:N, :N] if pad else grads_p
    loss = jnp.abs(jnp.sum(grads)) / N
    return loss, grads


def nonorm_loss_ref(Y, W):
    """Pure-JAX reference mirroring the PyTorch/scipy semantics (f32)."""
    N = W.shape[0]
    W0 = W - jnp.diag(jnp.diag(W))
    deg = W0.sum(axis=0)
    L = jnp.diag(deg) - W0
    hi = jax.lax.Precision.HIGHEST
    YLY = jnp.dot(L, Y, precision=hi) + jnp.dot(L.T, Y, precision=hi)
    DY = Y * jnp.diag(Y)[None, :]
    grads = YLY + DY
    loss = jnp.abs(jnp.sum(grads)) / N
    return loss, grads


def _check(loss, grads, loss_r, grads_r, N, rel_tol=5e-3):
    rel_g = jnp.linalg.norm(grads - grads_r) / (jnp.linalg.norm(grads_r) + 1e-30)
    assert rel_g < rel_tol, ("grads mismatch", float(rel_g))
    # |loss - loss_r| <= sum|grads - grads_r| / N  (triangle inequality),
    # plus a little slack for the f32 global sums themselves.
    atol = jnp.sum(jnp.abs(grads - grads_r)) / N + 1e-3 * jnp.abs(loss_r) + 1e-3
    assert jnp.abs(loss - loss_r) <= atol, (float(loss), float(loss_r))


if __name__ == "__main__":
    k1, k2, k3, k4 = jax.random.split(jax.random.PRNGKey(0), 4)

    # Case 1: multi-tile (2, 2, 2) grid -> exercises k-accumulation into the
    # resident output block and both megacore-parallel axes.
    N = 512
    Y = jax.random.normal(k1, (N, N), dtype=jnp.float32)
    W = jax.random.uniform(k2, (N, N), dtype=jnp.float32)   # non-negative weights
    loss, grads = nonorm_loss(Y, W, tm=256, tn=256, tk=256)
    jax.block_until_ready((loss, grads))
    loss_r, grads_r = nonorm_loss_ref(Y, W)
    _check(loss, grads, loss_r, grads_r, N)

    # Case 2: N not a tile multiple, default 512 tiles -> exercises zero-padding.
    N2 = 200
    Y2 = jax.random.normal(k3, (N2, N2), dtype=jnp.float32)
    W2 = jax.random.uniform(k4, (N2, N2), dtype=jnp.float32)
    loss2, grads2 = nonorm_loss(Y2, W2)
    jax.block_until_ready((loss2, grads2))
    loss2_r, grads2_r = nonorm_loss_ref(Y2, W2)
    _check(loss2, grads2, loss2_r, grads2_r, N2)

    print("KERNEL_OK")
</pallas_src>

<mosaic_0001>
module attributes {stable_mosaic.version = 11 : i64} {
  func.func @_nonorm_loss_kernel(%arg0: i32, %arg1: i32, %arg2: i32, %arg3: memref<256x1xf32, #tpu.memory_space<vmem>>, %arg4: memref<1x512xf32, #tpu.memory_space<vmem>>, %arg5: memref<256x256xbf16, #tpu.memory_space<vmem>>, %arg6: memref<256x256xbf16, #tpu.memory_space<vmem>>, %arg7: memref<256x256xf32, #tpu.memory_space<vmem>>, %arg8: memref<256x256xf32, #tpu.memory_space<vmem>>) attributes {dimension_semantics = [#tpu.dimension_semantics<parallel>, #tpu.dimension_semantics<parallel>, #tpu.dimension_semantics<arbitrary>], iteration_bounds = array<i64: 2, 2, 2>, scalar_prefetch = 0 : i64, scratch_operands = 0 : i64, tpu.core_type = #tpu.core_type<tc>, window_params = [{transform_indices = @transform_0, window_bounds = array<i64: 256, 1>}, {pipeline_mode = #tpu.pipeline_mode<synchronous>, transform_indices = @transform_1, window_bounds = array<i64: 1, 512>}, {transform_indices = @transform_2, window_bounds = array<i64: 256, 256>}, {transform_indices = @transform_3, window_bounds = array<i64: 256, 256>}, {transform_indices = @transform_4, window_bounds = array<i64: 256, 256>}, {transform_indices = @transform_5, window_bounds = array<i64: 256, 256>}]} {
    %c0_i32 = arith.constant 0 : i32
    %0 = arith.cmpi eq, %arg2, %c0_i32 : i32
    %1 = arith.extui %0 : i1 to i32
    %c0_i32_0 = arith.constant 0 : i32
    %2 = arith.cmpi ne, %1, %c0_i32_0 : i32
    scf.if %2 {
      %cst_9 = arith.constant 0.000000e+00 : f32
      %12 = vector.broadcast %cst_9 : f32 to vector<256x256xf32>
      %c0_10 = arith.constant 0 : index
      %c0_11 = arith.constant 0 : index
      %13 = vector.load %arg8[%c0_10, %c0_11] : memref<256x256xf32, #tpu.memory_space<vmem>>, vector<256x256xf32>
      tpu.vector_store %arg8[%c0_10, %c0_11], %12 {strides = array<i32>} : memref<256x256xf32, #tpu.memory_space<vmem>>, vector<256x256xf32>,
    } else {
    }
    %c0 = arith.constant 0 : index
    %c0_1 = arith.constant 0 : index
    %3 = vector.load %arg8[%c0, %c0_1] : memref<256x256xf32, #tpu.memory_space<vmem>>, vector<256x256xf32>
    %c0_2 = arith.constant 0 : index
    %c0_3 = arith.constant 0 : index
    %4 = vector.load %arg5[%c0_2, %c0_3] : memref<256x256xbf16, #tpu.memory_space<vmem>>, vector<256x256xbf16>
    %c0_4 = arith.constant 0 : index
    %c0_5 = arith.constant 0 : index
    %5 = vector.load %arg6[%c0_4, %c0_5] : memref<256x256xbf16, #tpu.memory_space<vmem>>, vector<256x256xbf16>
    %cst = arith.constant dense<0.000000e+00> : vector<256x256xf32>
    %6 = tpu.matmul %4, %5, %cst {dimension_numbers = #tpu.dot_dimension_numbers<[1], [0], [0], [1], [0, 0, 1, 1], [], []>} : vector<256x256xbf16>, vector<256x256xbf16>, vector<256x256xf32> -> vector<256x256xf32>
    %7 = arith.addf %3, %6 : vector<256x256xf32>
    %c0_6 = arith.constant 0 : index
    %c0_7 = arith.constant 0 : index
    %8 = vector.load %arg8[%c0_6, %c0_7] : memref<256x256xf32, #tpu.memory_space<vmem>>, vector<256x256xf32>
    tpu.vector_store %arg8[%c0_6, %c0_7], %7 {strides = array<i32>} : memref<256x256xf32, #tpu.memory_space<vmem>>, vector<256x256xf32>,
    %c1_i32 = arith.constant 1 : i32
    %9 = arith.cmpi eq, %arg2, %c1_i32 : i32
    %10 = arith.extui %9 : i1 to i32
    %c0_i32_8 = arith.constant 0 : i32
    %11 = arith.cmpi ne, %10, %c0_i32_8 : i32
    scf.if %11 {
      %c256_i32 = arith.constant 256 : i32
      %12 = arith.muli %arg1, %c256_i32 : i32
      %13 = tpu.assume_multiple %12, 128 : i32
      %c0_9 = arith.constant 0 : index
      %14 = arith.index_cast %13 : i32 to index
      %15 = vector.load %arg4[%c0_9, %14] : memref<1x512xf32, #tpu.memory_space<vmem>>, vector<1x256xf32>
      %c0_10 = arith.constant 0 : index
      %c0_11 = arith.constant 0 : index
      %16 = vector.load %arg8[%c0_10, %c0_11] : memref<256x256xf32, #tpu.memory_space<vmem>>, vector<256x256xf32>
      %c0_12 = arith.constant 0 : index
      %c0_13 = arith.constant 0 : index
      %17 = vector.load %arg7[%c0_12, %c0_13] : memref<256x256xf32, #tpu.memory_space<vmem>>, vector<256x256xf32>
      %c0_14 = arith.constant 0 : index
      %c0_15 = arith.constant 0 : index
      %18 = vector.load %arg3[%c0_14, %c0_15] : memref<256x1xf32, #tpu.memory_space<vmem>>, vector<256x1xf32>
      %19 = vector.broadcast %18 : vector<256x1xf32> to vector<256x256xf32>
      %20 = vector.broadcast %15 : vector<1x256xf32> to vector<256x256xf32>
      %21 = arith.addf %19, %20 : vector<256x256xf32>
      %22 = arith.mulf %17, %21 : vector<256x256xf32>
      %23 = arith.addf %16, %22 : vector<256x256xf32>
      %c0_16 = arith.constant 0 : index
      %c0_17 = arith.constant 0 : index
      %24 = vector.load %arg8[%c0_16, %c0_17] : memref<256x256xf32, #tpu.memory_space<vmem>>, vector<256x256xf32>
      tpu.vector_store %arg8[%c0_16, %c0_17], %23 {strides = array<i32>} : memref<256x256xf32, #tpu.memory_space<vmem>>, vector<256x256xf32>,
    } else {
    }
    return
  }
  func.func @transform_0(%arg0: i32, %arg1: i32, %arg2: i32) -> (i32, i32) {
    %c0_i32 = arith.constant 0 : i32
    %c0_i32_0 = arith.constant 0 : i32
    return %arg0, %c0_i32 : i32, i32
  }
  func.func @transform_1(%arg0: i32, %arg1: i32, %arg2: i32) -> (i32, i32) {
    %c0_i32 = arith.constant 0 : i32
    %c0_i32_0 = arith.constant 0 : i32
    %c0_i32_1 = arith.constant 0 : i32
    return %c0_i32, %c0_i32_0 : i32, i32
  }
  func.func @transform_2(%arg0: i32, %arg1: i32, %arg2: i32) -> (i32, i32) {
    %c0_i32 = arith.constant 0 : i32
    return %arg0, %arg2 : i32, i32
  }
  func.func @transform_3(%arg0: i32, %arg1: i32, %arg2: i32) -> (i32, i32) {
    %c0_i32 = arith.constant 0 : i32
    return %arg2, %arg1 : i32, i32
  }
  func.func @transform_4(%arg0: i32, %arg1: i32, %arg2: i32) -> (i32, i32) {
    %c0_i32 = arith.constant 0 : i32
    return %arg0, %arg1 : i32, i32
  }
  func.func @transform_5(%arg0: i32, %arg1: i32, %arg2: i32) -> (i32, i32) {
    %c0_i32 = arith.constant 0 : i32
    return %arg0, %arg1 : i32, i32
  }
}

</mosaic_0001>

<llo_original>
// kernel: tpu_custom_call.1
$region0: #{tpu_custom_call.1}
  #allocation0 [shape = 'u32[]', space=smem, size = 0x4, offset = 0x4, fixed_abs, tag = 'smem constant byte address 0x4 - core index']
  #allocation1 [shape = 'u32[72,128]{1,0:T(1,128)}', space=vmem, size = 0x9000, scoped, tag = 'internal scratch']
  %s0 = inlined_call_operand.vmem [shape: f32[512,1], index: 0, kind: input, shape index: {}]
  %s1 = inlined_call_operand.vmem [shape: f32[1,512], index: 1, kind: input, shape index: {}]
  %s2 = inlined_call_operand.hbm [shape: bf16[512,512], index: 2, kind: input, shape index: {}]
  %s3 = inlined_call_operand.hbm [shape: bf16[512,512], index: 3, kind: input, shape index: {}]
  %s4 = inlined_call_operand.hbm [shape: f32[512,512], index: 4, kind: input, shape index: {}]
  %s5 = inlined_call_operand.hbm [shape: f32[512,512], index: 5, kind: output, shape index: {}]
  %s6 = sld [smem:[#allocation0]]
  $region73: #{tpu_custom_call.1} parent=0
    _
  %s8 = ssub.s32 1, %s6
  %s9 = scalar_select 0, %s8, %s6
  $region1: #{tpu_custom_call.1} parent=0
    #allocation2 [shape = 'u8[262144]{0}', space=vmem, size = 0x40000, scoped, tag = 'input window, operand 2']
    #allocation3 [shape = 's32[2]{0}', space=sflag, size = 0x8, scoped, tag = 'scoped memory for tpu_custom_call.1']
    #allocation4 [shape = 's32[2]{0}', space=sflag, size = 0x8, scoped, tag = 'scoped memory for tpu_custom_call.1']
    #allocation5 [shape = 'u8[262144]{0}', space=vmem, size = 0x40000, scoped, tag = 'input window, operand 3']
    #allocation6 [shape = 's32[2]{0}', space=sflag, size = 0x8, scoped, tag = 'scoped memory for tpu_custom_call.1']
    #allocation7 [shape = 'u8[524288]{0}', space=vmem, size = 0x80000, scoped, tag = 'input window, operand 4']
    #allocation8 [shape = 'u8[524288]{0}', space=vmem, size = 0x80000, scoped, tag = 'output window, operand 0']
    %10 = vsyncpa [#allocation3], 0
    %s11 = scalar_lea.sflag [#allocation3], 1
    %12 = vsyncpa %s11, 0
    %13 = vsyncpa [#allocation6], 0
    %s14 = scalar_lea.sflag [#allocation6], 1
    %15 = vsyncpa %s14, 0
    %16 = vsyncpa [#allocation4], 0
    %s17 = scalar_lea.sflag [#allocation4], 1
    %18 = vsyncpa %s17, 0
    loop: start=0, step=1, limit=10
    $region2: #{tpu_custom_call.1} parent=1 // loop_pre_header
      _
    $region3: #{tpu_custom_call.1} parent=1 // loop_header
      %s20 = sphi 0, %s24
      %p21 = scmp.ge.s32.totalorder %s20, 10
      %s27 = sphi 0, %s46
      %s28 = sphi 0, %s42
      %s29 = sphi 0, %s38
      %s30 = sphi 0, %s27
      %s31 = sphi 0, %s28
      %s32 = sphi 0, %s29
      %s33 = sphi 0, %s30
      %s34 = sphi 0, %s31
      %s35 = sphi 0, %s32
      %s49 = sphi 0, %s51
      %s52 = sphi 0, %s49
      %s53 = sphi 0, %s52
      %s69 = sphi 0, %s53
      %s73 = sphi 0, %s73
      %s75 = sphi 0, %s73
      %s76 = sphi 0, %s75
      %s90 = sphi 0, %s76
      %s98 = sphi 0, %s100
      %s101 = sphi 0, %s98
      %s102 = sphi 0, %s101
      %s118 = sphi 0, %s102
      %s126 = sphi 0, %s128
      %s129 = sphi 0, %s126
      %s130 = sphi 0, %s129
      %s146 = sphi 0, %s130
      %s154 = sphi 0, %s156
      %s157 = sphi 0, %s154
      %s158 = sphi 0, %s157
      %s174 = sphi 0, %s158
      %s182 = sphi 0, %s184
      %s185 = sphi 0, %s182
      %s186 = sphi 0, %s185
      %s202 = sphi 0, %s186
    $region4: #{tpu_custom_call.1} parent=1 // loop_header_branch
      %23 = sbr.rel (%p21) target = $region8
    $region5: #{tpu_custom_call.1} parent=1 // loop_body
      %s25 = ssub.s32 %s20, 1
      %s26 = ssub.s32 %s20, 2
      %s36 = sadd.s32 1, %s29
      %p37 = scmp.ge.s32.totalorder %s36, 2
      %s38 = scalar_select %p37, 0, %s36
      %s39 = sadd.s32 1, %s28
      %s40 = scalar_select %p37, %s39, %s28
      %p41 = scmp.ge.s32.totalorder %s40, 2
      %s42 = scalar_select %p41, 0, %s40
      %s43 = sadd.s32 1, %s27
      %s44 = scalar_select %p41, %s43, %s27
      %p45 = scmp.ge.s32.totalorder %s44, 2
      %s46 = scalar_select %p45, 0, %s44
      %s47 = ssub.s32 %s27, %s46
      %p48 = scmp.eq.s32.totalorder %s47, 0
      %s50 = sadd.s32 %s49, 1
      %s51 = scalar_select %p48, %s49, %s50
      %p54 = pneg %p48
      %p55 = scmp.eq.s32.totalorder %s20, 7
      %p56 = por %p54, %p55
      %p57 = scmp.ne.s32.totalorder %s49, %s52
      %p58 = scmp.eq.s32.totalorder %s20, 0
      %p59 = por %p57, %p58
      %p60 = scmp.ne.s32.totalorder %s49, %s52
      %p61 = scmp.eq.s32.totalorder %s25, 7
      %p62 = por %p60, %p61
      %p63 = scmp.ne.s32.totalorder %s52, %s53
      %p64 = scmp.eq.s32.totalorder %s25, 0
      %p65 = por %p63, %p64
      %p66 = scmp.ne.s32.totalorder %s52, %s53
      %p67 = scmp.eq.s32.totalorder %s26, 7
      %p68 = por %p66, %p67
      %p70 = scmp.ne.s32.totalorder %s53, %s69
      %p71 = scmp.eq.s32.totalorder %s26, 0
      %p72 = por %p70, %p71
      %s74 = sadd.s32 %s73, 1
      %p77 = scmp.eq.s32.totalorder %s20, 7
      %p78 = scmp.ne.s32.totalorder %s73, %s75
      %p79 = scmp.eq.s32.totalorder %s20, 0
      %p80 = por %p78, %p79
      %p81 = scmp.ne.s32.totalorder %s73, %s75
      %p82 = scmp.eq.s32.totalorder %s25, 7
      %p83 = por %p81, %p82
      %p84 = scmp.ne.s32.totalorder %s75, %s76
      %p85 = scmp.eq.s32.totalorder %s25, 0
      %p86 = por %p84, %p85
      %p87 = scmp.ne.s32.totalorder %s75, %s76
      %p88 = scmp.eq.s32.totalorder %s26, 7
      %p89 = por %p87, %p88
      %p91 = scmp.ne.s32.totalorder %s76, %s90
      %p92 = scmp.eq.s32.totalorder %s26, 0
      %p93 = por %p91, %p92
      %s94 = ssub.s32 %s27, %s46
      %s95 = ssub.s32 %s29, %s38
      %s96 = sor.u32 %s94, %s95
      %p97 = scmp.eq.s32.totalorder %s96, 0
      %s99 = sadd.s32 %s98, 1
      %s100 = scalar_select %p97, %s98, %s99
      %p103 = pneg %p97
      %p104 = scmp.eq.s32.totalorder %s20, 7
      %p105 = por %p103, %p104
      %p106 = scmp.ne.s32.totalorder %s98, %s101
      %p107 = scmp.eq.s32.totalorder %s20, 0
      %p108 = por %p106, %p107
      %p109 = scmp.ne.s32.totalorder %s98, %s101
      %p110 = scmp.eq.s32.totalorder %s25, 7
      %p111 = por %p109, %p110
      %p112 = scmp.ne.s32.totalorder %s101, %s102
      %p113 = scmp.eq.s32.totalorder %s25, 0
      %p114 = por %p112, %p113
      %p115 = scmp.ne.s32.totalorder %s101, %s102
      %p116 = scmp.eq.s32.totalorder %s26, 7
      %p117 = por %p115, %p116
      %p119 = scmp.ne.s32.totalorder %s102, %s118
      %p120 = scmp.eq.s32.totalorder %s26, 0
      %p121 = por %p119, %p120
      %s122 = ssub.s32 %s29, %s38
      %s123 = ssub.s32 %s28, %s42
      %s124 = sor.u32 %s122, %s123
      %p125 = scmp.eq.s32.totalorder %s124, 0
      %s127 = sadd.s32 %s126, 1
      %s128 = scalar_select %p125, %s126, %s127
      %p131 = pneg %p125
      %p132 = scmp.eq.s32.totalorder %s20, 7
      %p133 = por %p131, %p132
      %p134 = scmp.ne.s32.totalorder %s126, %s129
      %p135 = scmp.eq.s32.totalorder %s20, 0
      %p136 = por %p134, %p135
      %p137 = scmp.ne.s32.totalorder %s126, %s129
      %p138 = scmp.eq.s32.totalorder %s25, 7
      %p139 = por %p137, %p138
      %p140 = scmp.ne.s32.totalorder %s129, %s130
      %p141 = scmp.eq.s32.totalorder %s25, 0
      %p142 = por %p140, %p141
      %p143 = scmp.ne.s32.totalorder %s129, %s130
      %p144 = scmp.eq.s32.totalorder %s26, 7
      %p145 = por %p143, %p144
      %p147 = scmp.ne.s32.totalorder %s130, %s146
      %p148 = scmp.eq.s32.totalorder %s26, 0
      %p149 = por %p147, %p148
      %s150 = ssub.s32 %s27, %s46
      %s151 = ssub.s32 %s28, %s42
      %s152 = sor.u32 %s150, %s151
      %p153 = scmp.eq.s32.totalorder %s152, 0
      %s155 = sadd.s32 %s154, 1
      %s156 = scalar_select %p153, %s154, %s155
      %p159 = pneg %p153
      %p160 = scmp.eq.s32.totalorder %s20, 7
      %p161 = por %p159, %p160
      %p162 = scmp.ne.s32.totalorder %s154, %s157
      %p163 = scmp.eq.s32.totalorder %s20, 0
      %p164 = por %p162, %p163
      %p165 = scmp.ne.s32.totalorder %s154, %s157
      %p166 = scmp.eq.s32.totalorder %s25, 7
      %p167 = por %p165, %p166
      %p168 = scmp.ne.s32.totalorder %s157, %s158
      %p169 = scmp.eq.s32.totalorder %s25, 0
      %p170 = por %p168, %p169
      %p171 = scmp.ne.s32.totalorder %s157, %s158
      %p172 = scmp.eq.s32.totalorder %s26, 7
      %p173 = por %p171, %p172
      %p175 = scmp.ne.s32.totalorder %s158, %s174
      %p176 = scmp.eq.s32.totalorder %s26, 0
      %p177 = por %p175, %p176
      %s178 = ssub.s32 %s27, %s46
      %s179 = ssub.s32 %s28, %s42
      %s180 = sor.u32 %s178, %s179
      %p181 = scmp.eq.s32.totalorder %s180, 0
      %s183 = sadd.s32 %s182, 1
      %s184 = scalar_select %p181, %s182, %s183
      %p187 = pneg %p181
      %p188 = scmp.eq.s32.totalorder %s20, 7
      %p189 = por %p187, %p188
      %p190 = scmp.ne.s32.totalorder %s182, %s185
      %p191 = scmp.eq.s32.totalorder %s20, 0
      %p192 = por %p190, %p191
      %p193 = scmp.ne.s32.totalorder %s182, %s185
      %p194 = scmp.eq.s32.totalorder %s25, 7
      %p195 = por %p193, %p194
      %p196 = scmp.ne.s32.totalorder %s185, %s186
      %p197 = scmp.eq.s32.totalorder %s25, 0
      %p198 = por %p196, %p197
      %p199 = scmp.ne.s32.totalorder %s185, %s186
      %p200 = scmp.eq.s32.totalorder %s26, 7
      %p201 = por %p199, %p200
      %p203 = scmp.ne.s32.totalorder %s186, %s202
      %p204 = scmp.eq.s32.totalorder %s26, 0
      %p205 = por %p203, %p204
      %p206 = scmp.le.s32.totalorder 1, %s20
      %p207 = scmp.lt.s32.totalorder %s20, 9
      %p208 = pnand %p206, %p207
      %p209 = pneg %p208
      // Predicated region
      $region9: #{tpu_custom_call.1} parent=5 // pred_check
        _
      $region10: #{tpu_custom_call.1} parent=5 // pred_check_branch
        %211 = sbr.rel (%p208) target = $region12
      $region11: #{tpu_custom_call.1} parent=5 // pred_region
        %s212 = ssub.s32 %s20, 1
        // Predicated region
        $region13: #{tpu_custom_call.1} parent=11 // pred_check
          %p213 = pneg %p86
        $region14: #{tpu_custom_call.1} parent=11 // pred_check_branch
          %215 = sbr.rel (%p213) target = $region16
        $region15: #{tpu_custom_call.1} parent=11 // pred_region
          _
        $region16: #{tpu_custom_call.1} parent=11 // pred_fallthru
          _
      $region12: #{tpu_custom_call.1} parent=5 // pred_fallthru
        _
      %p216 = scmp.lt.s32.totalorder %s20, 8
      // Predicated region
      $region17: #{tpu_custom_call.1} parent=5 // pred_check
        %p217 = pneg %p216
      $region18: #{tpu_custom_call.1} parent=5 // pred_check_branch
        %219 = sbr.rel (%p217) target = $region20
      $region19: #{tpu_custom_call.1} parent=5 // pred_region
        // Predicated region
        $region21: #{tpu_custom_call.1} parent=19 // pred_check
          %p220 = pneg %p59
        $region22: #{tpu_custom_call.1} parent=19 // pred_check_branch
          %222 = sbr.rel (%p220) target = $region24
        $region23: #{tpu_custom_call.1} parent=19 // pred_region
          %s223 = smul.u32 32, %s27
          %p224 = scmp.lt.s32.totalorder %s223, 63
          %s225 = scalar_select %p224, %s223, 63
          %s226 = smul.addr %s225, 8
          %s227 = scalar_lea.vmem %s0, %s226
          %s228 = smul.u32 32, %s27
        $region24: #{tpu_custom_call.1} parent=19 // pred_fallthru
          _
        // Predicated region
        $region25: #{tpu_custom_call.1} parent=19 // pred_check
          %p229 = pneg %p108
        $region26: #{tpu_custom_call.1} parent=19 // pred_check_branch
          %231 = sbr.rel (%p229) target = $region28
        $region27: #{tpu_custom_call.1} parent=19 // pred_region
          %s232 = sand.u32 %s98, 1
          %s233 = scalar_lea.sflag [#allocation3], %s232
          %s234 = sand.u32 %s98, 1
          %s235 = smul.addr %s234, 256
          %s236 = scalar_lea.vmem [#allocation2], %s235
          %s237 = smul.u32 32, %s27
          %s238 = smul.u32 2, %s29
          %240 = vsyncadd %s233, 0
          %s241 = smul.addr %s237, 4
          %s242 = sadd.s32 %s238, %s241
          %s243 = smul.addr %s242, 4
          %s244 = scalar_lea.hbm %s2, %s243
          %s245 = sshll.u32 %s244, 4
          %s246 = int_to_ptr.hbm [resolvable:$true] %s245
          %s247 = sshll.u32 %s236, 4
          %s248 = int_to_ptr.vmem [resolvable:$true] %s247
          %253 = dma.hbm_to_vmem [thread:$0]  %s246, 4096, %s248, %s233, 256, 128, 8
        $region28: #{tpu_custom_call.1} parent=19 // pred_fallthru
          _
        // Predicated region
        $region29: #{tpu_custom_call.1} parent=19 // pred_check
          %p254 = pneg %p136
        $region30: #{tpu_custom_call.1} parent=19 // pred_check_branch
          %256 = sbr.rel (%p254) target = $region32
        $region31: #{tpu_custom_call.1} parent=19 // pred_region
          %s257 = sand.u32 %s20, 1
          %s258 = scalar_lea.sflag [#allocation6], %s257
          %s259 = sand.u32 %s126, 1
          %s260 = smul.addr %s259, 256
          %s261 = scalar_lea.vmem [#allocation5], %s260
          %s262 = smul.u32 32, %s29
          %s263 = smul.u32 2, %s28
          %265 = vsyncadd %s258, 0
          %s266 = smul.addr %s262, 4
          %s267 = sadd.s32 %s263, %s266
          %s268 = smul.addr %s267, 4
          %s269 = scalar_lea.hbm %s3, %s268
          %s270 = sshll.u32 %s269, 4
          %s271 = int_to_ptr.hbm [resolvable:$true] %s270
          %s272 = sshll.u32 %s261, 4
          %s273 = int_to_ptr.vmem [resolvable:$true] %s272
          %278 = dma.hbm_to_vmem [thread:$0]  %s271, 4096, %s273, %s258, 256, 128, 8
        $region32: #{tpu_custom_call.1} parent=19 // pred_fallthru
          _
        // Predicated region
        $region33: #{tpu_custom_call.1} parent=19 // pred_check
          %p279 = pneg %p164
        $region34: #{tpu_custom_call.1} parent=19 // pred_check_branch
          %281 = sbr.rel (%p279) target = $region36
        $region35: #{tpu_custom_call.1} parent=19 // pred_region
          %s282 = sand.u32 %s20, 1
          %s283 = scalar_lea.sflag [#allocation6], %s282
          %s284 = sand.u32 %s154, 1
          %s285 = smul.addr %s284, 512
          %s286 = scalar_lea.vmem [#allocation7], %s285
          %s287 = smul.u32 32, %s27
          %s288 = smul.u32 2, %s28
          %290 = vsyncadd %s283, 0
          %s291 = smul.addr %s287, 4
          %s292 = sadd.s32 %s288, %s291
          %s293 = smul.addr %s292, 8
          %s294 = scalar_lea.hbm %s4, %s293
          %s295 = sshll.u32 %s294, 4
          %s296 = int_to_ptr.hbm [resolvable:$true] %s295
          %s297 = sshll.u32 %s286, 4
          %s298 = int_to_ptr.vmem [resolvable:$true] %s297
          %303 = dma.hbm_to_vmem [thread:$0]  %s296, 8192, %s298, %s283, 512, 256, 16
        $region36: #{tpu_custom_call.1} parent=19 // pred_fallthru
          _
      $region20: #{tpu_custom_call.1} parent=5 // pred_fallthru
        _
      %p304 = scmp.le.s32.totalorder 1, %s20
      %p305 = scmp.lt.s32.totalorder %s20, 9
      %p306 = pnand %p304, %p305
      %p307 = pneg %p306
      // Predicated region
      $region37: #{tpu_custom_call.1} parent=5 // pred_check
        _
      $region38: #{tpu_custom_call.1} parent=5 // pred_check_branch
        %309 = sbr.rel (%p306) target = $region40
      $region39: #{tpu_custom_call.1} parent=5 // pred_region
        %s310 = ssub.s32 %s20, 1
        %s311 = sand.u32 %s101, 1
        %s312 = scalar_lea.sflag [#allocation3], %s311
        %s313 = sand.u32 %s101, 1
        %s314 = smul.addr %s313, 256
        %s315 = scalar_lea.vmem [#allocation2], %s314
        // Predicated region
        $region41: #{tpu_custom_call.1} parent=39 // pred_check
          %p316 = pneg %p114
        $region42: #{tpu_custom_call.1} parent=39 // pred_check_branch
          %318 = sbr.rel (%p316) target = $region44
        $region43: #{tpu_custom_call.1} parent=39 // pred_region
          %320 = dma.done %s312, 4096
        $region44: #{tpu_custom_call.1} parent=39 // pred_fallthru
          _
        %s321 = sand.u32 %s25, 1
        %s322 = scalar_lea.sflag [#allocation6], %s321
        %s323 = sand.u32 %s129, 1
        %s324 = smul.addr %s323, 256
        %s325 = scalar_lea.vmem [#allocation5], %s324
        // Predicated region
        $region45: #{tpu_custom_call.1} parent=39 // pred_check
          %p326 = pneg %p142
        $region46: #{tpu_custom_call.1} parent=39 // pred_check_branch
          %328 = sbr.rel (%p326) target = $region48
        $region47: #{tpu_custom_call.1} parent=39 // pred_region
          %330 = dma.done %s322, 4096
        $region48: #{tpu_custom_call.1} parent=39 // pred_fallthru
          _
        %s331 = sand.u32 %s25, 1
        %s332 = scalar_lea.sflag [#allocation6], %s331
        %s333 = sand.u32 %s157, 1
        %s334 = smul.addr %s333, 512
        %s335 = scalar_lea.vmem [#allocation7], %s334
        // Predicated region
        $region49: #{tpu_custom_call.1} parent=39 // pred_check
          %p336 = pneg %p170
        $region50: #{tpu_custom_call.1} parent=39 // pred_check_branch
          %338 = sbr.rel (%p336) target = $region52
        $region51: #{tpu_custom_call.1} parent=39 // pred_region
          %340 = dma.done %s332, 8192
        $region52: #{tpu_custom_call.1} parent=39 // pred_fallthru
          _
        %s341 = smul.u32 32, %s30
        %p342 = scmp.lt.s32.totalorder %s341, 63
        %s343 = scalar_select %p342, %s341, 63
        %s344 = smul.addr %s343, 8
        %s345 = scalar_lea.vmem %s0, %s344
        %p346 = pneg %p65
        %p347 = pneg %p62
        %p348 = pneg %p86
        %p349 = pneg %p83
        %s350 = sand.u32 %s101, 1
        %s351 = scalar_lea.sflag [#allocation3], %s350
        %s352 = sand.u32 %s101, 1
        %s353 = smul.addr %s352, 256
        %s354 = scalar_lea.vmem [#allocation2], %s353
        %p355 = pneg %p114
        %p356 = pneg %p111
        %s357 = sand.u32 %s25, 1
        %s358 = scalar_lea.sflag [#allocation6], %s357
        %s359 = sand.u32 %s129, 1
        %s360 = smul.addr %s359, 256
        %s361 = scalar_lea.vmem [#allocation5], %s360
        %p362 = pneg %p142
        %p363 = pneg %p139
        %s364 = sand.u32 %s25, 1
        %s365 = scalar_lea.sflag [#allocation6], %s364
        %s366 = sand.u32 %s157, 1
        %s367 = smul.addr %s366, 512
        %s368 = scalar_lea.vmem [#allocation7], %s367
        %p369 = pneg %p170
        %p370 = pneg %p167
        %p371 = pneg %p198
        %p372 = pneg %p195
        %s373 = sand.u32 %s185, 1
        %s374 = scalar_lea.sflag [#allocation4], %s373
        %s375 = sand.u32 %s185, 1
        %s376 = smul.addr %s375, 512
        %s377 = scalar_lea.vmem [#allocation8], %s376
        %s378 = smul.u32 32, %s30
        %p379 = scmp.lt.s32.totalorder %s378, 63
        %s380 = scalar_select %p379, %s378, 63
        %s381 = smul.addr %s380, 8
        %s382 = scalar_lea.vmem %s0, %s381
        %s383 = smul.u32 32, %s30
        %s384 = smul.u32 32, %s30
        %s385 = smul.u32 2, %s32
        %s386 = smul.u32 32, %s32
        %s387 = smul.u32 2, %s31
        %s388 = smul.u32 32, %s30
        %s389 = smul.u32 2, %s31
        %s390 = smul.u32 32, %s30
        %s391 = smul.u32 2, %s31
        %p392 = scmp.eq.s32.totalorder %s32, 0
        // Predicated region
        $region53: #{tpu_custom_call.1} parent=39 // pred_check
          %p393 = pneg %p392
        $region54: #{tpu_custom_call.1} parent=39 // pred_check_branch
          %395 = sbr.rel (%p393) target = $region56
        $region55: #{tpu_custom_call.1} parent=39 // pred_region
          %396 = vst [vmem:[%s377] sm:$0xff] 0.0
          %397 = vst [vmem:[%s377 + $0x8] sm:$0xff] 0.0
          %398 = vst [vmem:[%s377 + $0x10] sm:$0xff] 0.0
          %399 = vst [vmem:[%s377 + $0x18] sm:$0xff] 0.0
          %400 = vst [vmem:[%s377 + $0x20] sm:$0xff] 0.0
          %401 = vst [vmem:[%s377 + $0x28] sm:$0xff] 0.0
          %402 = vst [vmem:[%s377 + $0x30] sm:$0xff] 0.0
          %403 = vst [vmem:[%s377 + $0x38] sm:$0xff] 0.0
          %404 = vst [vmem:[%s377 + $0x40] sm:$0xff] 0.0
          %405 = vst [vmem:[%s377 + $0x48] sm:$0xff] 0.0
          %406 = vst [vmem:[%s377 + $0x50] sm:$0xff] 0.0
          %407 = vst [vmem:[%s377 + $0x58] sm:$0xff] 0.0
          %408 = vst [vmem:[%s377 + $0x60] sm:$0xff] 0.0
          %409 = vst [vmem:[%s377 + $0x68] sm:$0xff] 0.0
          %410 = vst [vmem:[%s377 + $0x70] sm:$0xff] 0.0
          %411 = vst [vmem:[%s377 + $0x78] sm:$0xff] 0.0
          %412 = vst [vmem:[%s377 + $0x80] sm:$0xff] 0.0
          %413 = vst [vmem:[%s377 + $0x88] sm:$0xff] 0.0
          %414 = vst [vmem:[%s377 + $0x90] sm:$0xff] 0.0
          %415 = vst [vmem:[%s377 + $0x98] sm:$0xff] 0.0
          %416 = vst [vmem:[%s377 + $0xa0] sm:$0xff] 0.0
          %417 = vst [vmem:[%s377 + $0xa8] sm:$0xff] 0.0
          %418 = vst [vmem:[%s377 + $0xb0] sm:$0xff] 0.0
          %419 = vst [vmem:[%s377 + $0xb8] sm:$0xff] 0.0
          %420 = vst [vmem:[%s377 + $0xc0] sm:$0xff] 0.0
          %421 = vst [vmem:[%s377 + $0xc8] sm:$0xff] 0.0
          %422 = vst [vmem:[%s377 + $0xd0] sm:$0xff] 0.0
          %423 = vst [vmem:[%s377 + $0xd8] sm:$0xff] 0.0
          %424 = vst [vmem:[%s377 + $0xe0] sm:$0xff] 0.0
          %425 = vst [vmem:[%s377 + $0xe8] sm:$0xff] 0.0
          %426 = vst [vmem:[%s377 + $0xf0] sm:$0xff] 0.0
          %427 = vst [vmem:[%s377 + $0xf8] sm:$0xff] 0.0
          %428 = vst [vmem:[%s377 + $0x100] sm:$0xff] 0.0
          %429 = vst [vmem:[%s377 + $0x108] sm:$0xff] 0.0
          %430 = vst [vmem:[%s377 + $0x110] sm:$0xff] 0.0
          %431 = vst [vmem:[%s377 + $0x118] sm:$0xff] 0.0
          %432 = vst [vmem:[%s377 + $0x120] sm:$0xff] 0.0
          %433 = vst [vmem:[%s377 + $0x128] sm:$0xff] 0.0
          %434 = vst [vmem:[%s377 + $0x130] sm:$0xff] 0.0
          %435 = vst [vmem:[%s377 + $0x138] sm:$0xff] 0.0
          %436 = vst [vmem:[%s377 + $0x140] sm:$0xff] 0.0
          %437 = vst [vmem:[%s377 + $0x148] sm:$0xff] 0.0
          %438 = vst [vmem:[%s377 + $0x150] sm:$0xff] 0.0
          %439 = vst [vmem:[%s377 + $0x158] sm:$0xff] 0.0
          %440 = vst [vmem:[%s377 + $0x160] sm:$0xff] 0.0
          %441 = vst [vmem:[%s377 + $0x168] sm:$0xff] 0.0
          %442 = vst [vmem:[%s377 + $0x170] sm:$0xff] 0.0
          %443 = vst [vmem:[%s377 + $0x178] sm:$0xff] 0.0
          %444 = vst [vmem:[%s377 + $0x180] sm:$0xff] 0.0
          %445 = vst [vmem:[%s377 + $0x188] sm:$0xff] 0.0
          %446 = vst [vmem:[%s377 + $0x190] sm:$0xff] 0.0
          %447 = vst [vmem:[%s377 + $0x198] sm:$0xff] 0.0
          %448 = vst [vmem:[%s377 + $0x1a0] sm:$0xff] 0.0
          %449 = vst [vmem:[%s377 + $0x1a8] sm:$0xff] 0.0
          %450 = vst [vmem:[%s377 + $0x1b0] sm:$0xff] 0.0
          %451 = vst [vmem:[%s377 + $0x1b8] sm:$0xff] 0.0
          %452 = vst [vmem:[%s377 + $0x1c0] sm:$0xff] 0.0
          %453 = vst [vmem:[%s377 + $0x1c8] sm:$0xff] 0.0
          %454 = vst [vmem:[%s377 + $0x1d0] sm:$0xff] 0.0
          %455 = vst [vmem:[%s377 + $0x1d8] sm:$0xff] 0.0
          %456 = vst [vmem:[%s377 + $0x1e0] sm:$0xff] 0.0
          %457 = vst [vmem:[%s377 + $0x1e8] sm:$0xff] 0.0
          %458 = vst [vmem:[%s377 + $0x1f0] sm:$0xff] 0.0
          %459 = vst [vmem:[%s377 + $0x1f8] sm:$0xff] 0.0
        $region56: #{tpu_custom_call.1} parent=39 // pred_fallthru
          _
        %v460 = vld [vmem:[%s377] sm:$0xff]
        %v461 = vld [vmem:[%s377 + $0x8] sm:$0xff]
        %v462 = vld [vmem:[%s377 + $0x10] sm:$0xff]
        %v463 = vld [vmem:[%s377 + $0x18] sm:$0xff]
        %v464 = vld [vmem:[%s377 + $0x20] sm:$0xff]
        %v465 = vld [vmem:[%s377 + $0x28] sm:$0xff]
        %v466 = vld [vmem:[%s377 + $0x30] sm:$0xff]
        %v467 = vld [vmem:[%s377 + $0x38] sm:$0xff]
        %v468 = vld [vmem:[%s377 + $0x40] sm:$0xff]
        %v469 = vld [vmem:[%s377 + $0x48] sm:$0xff]
        %v470 = vld [vmem:[%s377 + $0x50] sm:$0xff]
        %v471 = vld [vmem:[%s377 + $0x58] sm:$0xff]
        %v472 = vld [vmem:[%s377 + $0x60] sm:$0xff]
        %v473 = vld [vmem:[%s377 + $0x68] sm:$0xff]
        %v474 = vld [vmem:[%s377 + $0x70] sm:$0xff]
        %v475 = vld [vmem:[%s377 + $0x78] sm:$0xff]
        %v476 = vld [vmem:[%s377 + $0x80] sm:$0xff]
        %v477 = vld [vmem:[%s377 + $0x88] sm:$0xff]
        %v478 = vld [vmem:[%s377 + $0x90] sm:$0xff]
        %v479 = vld [vmem:[%s377 + $0x98] sm:$0xff]
        %v480 = vld [vmem:[%s377 + $0xa0] sm:$0xff]
        %v481 = vld [vmem:[%s377 + $0xa8] sm:$0xff]
        %v482 = vld [vmem:[%s377 + $0xb0] sm:$0xff]
        %v483 = vld [vmem:[%s377 + $0xb8] sm:$0xff]
        %v484 = vld [vmem:[%s377 + $0xc0] sm:$0xff]
        %v485 = vld [vmem:[%s377 + $0xc8] sm:$0xff]
        %v486 = vld [vmem:[%s377 + $0xd0] sm:$0xff]
        %v487 = vld [vmem:[%s377 + $0xd8] sm:$0xff]
        %v488 = vld [vmem:[%s377 + $0xe0] sm:$0xff]
        %v489 = vld [vmem:[%s377 + $0xe8] sm:$0xff]
        %v490 = vld [vmem:[%s377 + $0xf0] sm:$0xff]
        %v491 = vld [vmem:[%s377 + $0xf8] sm:$0xff]
        %v492 = vld [vmem:[%s377 + $0x100] sm:$0xff]
        %v493 = vld [vmem:[%s377 + $0x108] sm:$0xff]
        %v494 = vld [vmem:[%s377 + $0x110] sm:$0xff]
        %v495 = vld [vmem:[%s377 + $0x118] sm:$0xff]
        %v496 = vld [vmem:[%s377 + $0x120] sm:$0xff]
        %v497 = vld [vmem:[%s377 + $0x128] sm:$0xff]
        %v498 = vld [vmem:[%s377 + $0x130] sm:$0xff]
        %v499 = vld [vmem:[%s377 + $0x138] sm:$0xff]
        %v500 = vld [vmem:[%s377 + $0x140] sm:$0xff]
        %v501 = vld [vmem:[%s377 + $0x148] sm:$0xff]
        %v502 = vld [vmem:[%s377 + $0x150] sm:$0xff]
        %v503 = vld [vmem:[%s377 + $0x158] sm:$0xff]
        %v504 = vld [vmem:[%s377 + $0x160] sm:$0xff]
        %v505 = vld [vmem:[%s377 + $0x168] sm:$0xff]
        %v506 = vld [vmem:[%s377 + $0x170] sm:$0xff]
        %v507 = vld [vmem:[%s377 + $0x178] sm:$0xff]
        %v508 = vld [vmem:[%s377 + $0x180] sm:$0xff]
        %v509 = vld [vmem:[%s377 + $0x188] sm:$0xff]
        %v510 = vld [vmem:[%s377 + $0x190] sm:$0xff]
        %v511 = vld [vmem:[%s377 + $0x198] sm:$0xff]
        %v512 = vld [vmem:[%s377 + $0x1a0] sm:$0xff]
        %v513 = vld [vmem:[%s377 + $0x1a8] sm:$0xff]
        %v514 = vld [vmem:[%s377 + $0x1b0] sm:$0xff]
        %v515 = vld [vmem:[%s377 + $0x1b8] sm:$0xff]
        %v516 = vld [vmem:[%s377 + $0x1c0] sm:$0xff]
        %v517 = vld [vmem:[%s377 + $0x1c8] sm:$0xff]
        %v518 = vld [vmem:[%s377 + $0x1d0] sm:$0xff]
        %v519 = vld [vmem:[%s377 + $0x1d8] sm:$0xff]
        %v520 = vld [vmem:[%s377 + $0x1e0] sm:$0xff]
        %v521 = vld [vmem:[%s377 + $0x1e8] sm:$0xff]
        %v522 = vld [vmem:[%s377 + $0x1f0] sm:$0xff]
        %v523 = vld [vmem:[%s377 + $0x1f8] sm:$0xff]
        %v524 = vld [vmem:[%s315] sm:$0xff]
        %v525 = vld [vmem:[%s315 + $0x8] sm:$0xff]
        %v526 = vld [vmem:[%s315 + $0x10] sm:$0xff]
        %v527 = vld [vmem:[%s315 + $0x18] sm:$0xff]
        %v528 = vld [vmem:[%s315 + $0x20] sm:$0xff]
        %v529 = vld [vmem:[%s315 + $0x28] sm:$0xff]
        %v530 = vld [vmem:[%s315 + $0x30] sm:$0xff]
        %v531 = vld [vmem:[%s315 + $0x38] sm:$0xff]
        %v532 = vld [vmem:[%s315 + $0x40] sm:$0xff]
        %v533 = vld [vmem:[%s315 + $0x48] sm:$0xff]
        %v534 = vld [vmem:[%s315 + $0x50] sm:$0xff]
        %v535 = vld [vmem:[%s315 + $0x58] sm:$0xff]
        %v536 = vld [vmem:[%s315 + $0x60] sm:$0xff]
        %v537 = vld [vmem:[%s315 + $0x68] sm:$0xff]
        %v538 = vld [vmem:[%s315 + $0x70] sm:$0xff]
        %v539 = vld [vmem:[%s315 + $0x78] sm:$0xff]
        %v540 = vld [vmem:[%s315 + $0x80] sm:$0xff]
        %v541 = vld [vmem:[%s315 + $0x88] sm:$0xff]
        %v542 = vld [vmem:[%s315 + $0x90] sm:$0xff]
        %v543 = vld [vmem:[%s315 + $0x98] sm:$0xff]
        %v544 = vld [vmem:[%s315 + $0xa0] sm:$0xff]
        %v545 = vld [vmem:[%s315 + $0xa8] sm:$0xff]
        %v546 = vld [vmem:[%s315 + $0xb0] sm:$0xff]
        %v547 = vld [vmem:[%s315 + $0xb8] sm:$0xff]
        %v548 = vld [vmem:[%s315 + $0xc0] sm:$0xff]
        %v549 = vld [vmem:[%s315 + $0xc8] sm:$0xff]
        %v550 = vld [vmem:[%s315 + $0xd0] sm:$0xff]
        %v551 = vld [vmem:[%s315 + $0xd8] sm:$0xff]
        %v552 = vld [vmem:[%s315 + $0xe0] sm:$0xff]
        %v553 = vld [vmem:[%s315 + $0xe8] sm:$0xff]
        %v554 = vld [vmem:[%s315 + $0xf0] sm:$0xff]
        %v555 = vld [vmem:[%s315 + $0xf8] sm:$0xff]
        %v556 = vld [vmem:[%s325] sm:$0xff]
        %v557 = vld [vmem:[%s325 + $0x8] sm:$0xff]
        %v558 = vld [vmem:[%s325 + $0x10] sm:$0xff]
        %v559 = vld [vmem:[%s325 + $0x18] sm:$0xff]
        %v560 = vld [vmem:[%s325 + $0x20] sm:$0xff]
        %v561 = vld [vmem:[%s325 + $0x28] sm:$0xff]
        %v562 = vld [vmem:[%s325 + $0x30] sm:$0xff]
        %v563 = vld [vmem:[%s325 + $0x38] sm:$0xff]
        %v564 = vld [vmem:[%s325 + $0x40] sm:$0xff]
        %v565 = vld [vmem:[%s325 + $0x48] sm:$0xff]
        %v566 = vld [vmem:[%s325 + $0x50] sm:$0xff]
        %v567 = vld [vmem:[%s325 + $0x58] sm:$0xff]
        %v568 = vld [vmem:[%s325 + $0x60] sm:$0xff]
        %v569 = vld [vmem:[%s325 + $0x68] sm:$0xff]
        %v570 = vld [vmem:[%s325 + $0x70] sm:$0xff]
        %v571 = vld [vmem:[%s325 + $0x78] sm:$0xff]
        %v572 = vld [vmem:[%s325 + $0x80] sm:$0xff]
        %v573 = vld [vmem:[%s325 + $0x88] sm:$0xff]
        %v574 = vld [vmem:[%s325 + $0x90] sm:$0xff]
        %v575 = vld [vmem:[%s325 + $0x98] sm:$0xff]
        %v576 = vld [vmem:[%s325 + $0xa0] sm:$0xff]
        %v577 = vld [vmem:[%s325 + $0xa8] sm:$0xff]
        %v578 = vld [vmem:[%s325 + $0xb0] sm:$0xff]
        %v579 = vld [vmem:[%s325 + $0xb8] sm:$0xff]
        %v580 = vld [vmem:[%s325 + $0xc0] sm:$0xff]
        %v581 = vld [vmem:[%s325 + $0xc8] sm:$0xff]
        %v582 = vld [vmem:[%s325 + $0xd0] sm:$0xff]
        %v583 = vld [vmem:[%s325 + $0xd8] sm:$0xff]
        %v584 = vld [vmem:[%s325 + $0xe0] sm:$0xff]
        %v585 = vld [vmem:[%s325 + $0xe8] sm:$0xff]
        %v586 = vld [vmem:[%s325 + $0xf0] sm:$0xff]
        %v587 = vld [vmem:[%s325 + $0xf8] sm:$0xff]
        %v620 = vunpack.c.l.b16 %v524
        %v621 = vunpack.c.h.b16 %v524
        %v622 = vunpack.c.l.b16 %v525
        %v623 = vunpack.c.h.b16 %v525
        %v624 = vunpack.c.l.b16 %v526
        %v625 = vunpack.c.h.b16 %v526
        %v626 = vunpack.c.l.b16 %v527
        %v627 = vunpack.c.h.b16 %v527
        %v628 = vunpack.c.l.b16 %v528
        %v629 = vunpack.c.h.b16 %v528
        %v630 = vunpack.c.l.b16 %v529
        %v631 = vunpack.c.h.b16 %v529
        %v632 = vunpack.c.l.b16 %v530
        %v633 = vunpack.c.h.b16 %v530
        %v634 = vunpack.c.l.b16 %v531
        %v635 = vunpack.c.h.b16 %v531
        %v636 = vunpack.c.l.b16 %v532
        %v637 = vunpack.c.h.b16 %v532
        %v638 = vunpack.c.l.b16 %v533
        %v639 = vunpack.c.h.b16 %v533
        %v640 = vunpack.c.l.b16 %v534
        %v641 = vunpack.c.h.b16 %v534
        %v642 = vunpack.c.l.b16 %v535
        %v643 = vunpack.c.h.b16 %v535
        %v644 = vunpack.c.l.b16 %v536
        %v645 = vunpack.c.h.b16 %v536
        %v646 = vunpack.c.l.b16 %v537
        %v647 = vunpack.c.h.b16 %v537
        %v648 = vunpack.c.l.b16 %v538
        %v649 = vunpack.c.h.b16 %v538
        %v650 = vunpack.c.l.b16 %v539
        %v651 = vunpack.c.h.b16 %v539
        %v652 = vunpack.c.l.b16 %v540
        %v653 = vunpack.c.h.b16 %v540
        %v654 = vunpack.c.l.b16 %v541
        %v655 = vunpack.c.h.b16 %v541
        %v656 = vunpack.c.l.b16 %v542
        %v657 = vunpack.c.h.b16 %v542
        %v658 = vunpack.c.l.b16 %v543
        %v659 = vunpack.c.h.b16 %v543
        %v660 = vunpack.c.l.b16 %v544
        %v661 = vunpack.c.h.b16 %v544
        %v662 = vunpack.c.l.b16 %v545
        %v663 = vunpack.c.h.b16 %v545
        %v664 = vunpack.c.l.b16 %v546
        %v665 = vunpack.c.h.b16 %v546
        %v666 = vunpack.c.l.b16 %v547
        %v667 = vunpack.c.h.b16 %v547
        %v668 = vunpack.c.l.b16 %v548
        %v669 = vunpack.c.h.b16 %v548
        %v670 = vunpack.c.l.b16 %v549
        %v671 = vunpack.c.h.b16 %v549
        %v672 = vunpack.c.l.b16 %v550
        %v673 = vunpack.c.h.b16 %v550
        %v674 = vunpack.c.l.b16 %v551
        %v675 = vunpack.c.h.b16 %v551
        %v676 = vunpack.c.l.b16 %v552
        %v677 = vunpack.c.h.b16 %v552
        %v678 = vunpack.c.l.b16 %v553
        %v679 = vunpack.c.h.b16 %v553
        %v680 = vunpack.c.l.b16 %v554
        %v681 = vunpack.c.h.b16 %v554
        %v682 = vunpack.c.l.b16 %v555
        %v683 = vunpack.c.h.b16 %v555
        %v684 = vpack.c.b16 %v622, %v620
        %v685 = vpack.c.b16 %v623, %v621
        %v686 = vpack.c.b16 %v626, %v624
        %v687 = vpack.c.b16 %v627, %v625
        %v688 = vpack.c.b16 %v630, %v628
        %v689 = vpack.c.b16 %v631, %v629
        %v690 = vpack.c.b16 %v634, %v632
        %v691 = vpack.c.b16 %v635, %v633
        %v692 = vpack.c.b16 %v638, %v636
        %v693 = vpack.c.b16 %v639, %v637
        %v694 = vpack.c.b16 %v642, %v640
        %v695 = vpack.c.b16 %v643, %v641
        %v696 = vpack.c.b16 %v646, %v644
        %v697 = vpack.c.b16 %v647, %v645
        %v698 = vpack.c.b16 %v650, %v648
        %v699 = vpack.c.b16 %v651, %v649
        %v700 = vpack.c.b16 %v654, %v652
        %v701 = vpack.c.b16 %v655, %v653
        %v702 = vpack.c.b16 %v658, %v656
        %v703 = vpack.c.b16 %v659, %v657
        %v704 = vpack.c.b16 %v662, %v660
        %v705 = vpack.c.b16 %v663, %v661
        %v706 = vpack.c.b16 %v666, %v664
        %v707 = vpack.c.b16 %v667, %v665
        %v708 = vpack.c.b16 %v670, %v668
        %v709 = vpack.c.b16 %v671, %v669
        %v710 = vpack.c.b16 %v674, %v672
        %v711 = vpack.c.b16 %v675, %v673
        %v712 = vpack.c.b16 %v678, %v676
        %v713 = vpack.c.b16 %v679, %v677
        %v714 = vpack.c.b16 %v682, %v680
        %v715 = vpack.c.b16 %v683, %v681
        %v780 = vunpack.c.l.b16 %v556
        %v781 = vunpack.c.h.b16 %v556
        %v782 = vunpack.c.l.b16 %v557
        %v783 = vunpack.c.h.b16 %v557
        %v784 = vunpack.c.l.b16 %v558
        %v785 = vunpack.c.h.b16 %v558
        %v786 = vunpack.c.l.b16 %v559
        %v787 = vunpack.c.h.b16 %v559
        %v788 = vunpack.c.l.b16 %v560
        %v789 = vunpack.c.h.b16 %v560
        %v790 = vunpack.c.l.b16 %v561
        %v791 = vunpack.c.h.b16 %v561
        %v792 = vunpack.c.l.b16 %v562
        %v793 = vunpack.c.h.b16 %v562
        %v794 = vunpack.c.l.b16 %v563
        %v795 = vunpack.c.h.b16 %v563
        %v796 = vunpack.c.l.b16 %v564
        %v797 = vunpack.c.h.b16 %v564
        %v798 = vunpack.c.l.b16 %v565
        %v799 = vunpack.c.h.b16 %v565
        %v800 = vunpack.c.l.b16 %v566
        %v801 = vunpack.c.h.b16 %v566
        %v802 = vunpack.c.l.b16 %v567
        %v803 = vunpack.c.h.b16 %v567
        %v804 = vunpack.c.l.b16 %v568
        %v805 = vunpack.c.h.b16 %v568
        %v806 = vunpack.c.l.b16 %v569
        %v807 = vunpack.c.h.b16 %v569
        %v808 = vunpack.c.l.b16 %v570
        %v809 = vunpack.c.h.b16 %v570
        %v810 = vunpack.c.l.b16 %v571
        %v811 = vunpack.c.h.b16 %v571
        %v812 = vunpack.c.l.b16 %v572
        %v813 = vunpack.c.h.b16 %v572
        %v814 = vunpack.c.l.b16 %v573
        %v815 = vunpack.c.h.b16 %v573
        %v816 = vunpack.c.l.b16 %v574
        %v817 = vunpack.c.h.b16 %v574
        %v818 = vunpack.c.l.b16 %v575
        %v819 = vunpack.c.h.b16 %v575
        %v820 = vunpack.c.l.b16 %v576
        %v821 = vunpack.c.h.b16 %v576
        %v822 = vunpack.c.l.b16 %v577
        %v823 = vunpack.c.h.b16 %v577
        %v824 = vunpack.c.l.b16 %v578
        %v825 = vunpack.c.h.b16 %v578
        %v826 = vunpack.c.l.b16 %v579
        %v827 = vunpack.c.h.b16 %v579
        %v828 = vunpack.c.l.b16 %v580
        %v829 = vunpack.c.h.b16 %v580
        %v830 = vunpack.c.l.b16 %v581
        %v831 = vunpack.c.h.b16 %v581
        %v832 = vunpack.c.l.b16 %v582
        %v833 = vunpack.c.h.b16 %v582
        %v834 = vunpack.c.l.b16 %v583
        %v835 = vunpack.c.h.b16 %v583
        %v836 = vunpack.c.l.b16 %v584
        %v837 = vunpack.c.h.b16 %v584
        %v838 = vunpack.c.l.b16 %v585
        %v839 = vunpack.c.h.b16 %v585
        %v840 = vunpack.c.l.b16 %v586
        %v841 = vunpack.c.h.b16 %v586
        %v842 = vunpack.c.l.b16 %v587
        %v843 = vunpack.c.h.b16 %v587
        %v844 = vpack.c.b16 %v782, %v780
        %v845 = vpack.c.b16 %v783, %v781
        %v846 = vpack.c.b16 %v786, %v784
        %v847 = vpack.c.b16 %v787, %v785
        %v848 = vpack.c.b16 %v790, %v788
        %v849 = vpack.c.b16 %v791, %v789
        %v850 = vpack.c.b16 %v794, %v792
        %v851 = vpack.c.b16 %v795, %v793
        %v852 = vpack.c.b16 %v798, %v796
        %v853 = vpack.c.b16 %v799, %v797
        %v854 = vpack.c.b16 %v802, %v800
        %v855 = vpack.c.b16 %v803, %v801
        %v856 = vpack.c.b16 %v806, %v804
        %v857 = vpack.c.b16 %v807, %v805
        %v858 = vpack.c.b16 %v810, %v808
        %v859 = vpack.c.b16 %v811, %v809
        %v860 = vpack.c.b16 %v814, %v812
        %v861 = vpack.c.b16 %v815, %v813
        %v862 = vpack.c.b16 %v818, %v816
        %v863 = vpack.c.b16 %v819, %v817
        %v864 = vpack.c.b16 %v822, %v820
        %v865 = vpack.c.b16 %v823, %v821
        %v866 = vpack.c.b16 %v826, %v824
        %v867 = vpack.c.b16 %v827, %v825
        %v868 = vpack.c.b16 %v830, %v828
        %v869 = vpack.c.b16 %v831, %v829
        %v870 = vpack.c.b16 %v834, %v832
        %v871 = vpack.c.b16 %v835, %v833
        %v872 = vpack.c.b16 %v838, %v836
        %v873 = vpack.c.b16 %v839, %v837
        %v874 = vpack.c.b16 %v842, %v840
        %v875 = vpack.c.b16 %v843, %v841
        %908 = vmatpush.bf16.msra.mxu0 %v858
        %909 = vmatpush.bf16.msra.mxu0 %v856
        %910 = vmatpush.bf16.msra.mxu0 %v854
        %911 = vmatpush.bf16.msra.mxu0 %v852
        %912 = vmatpush.bf16.msra.mxu0 %v850
        %913 = vmatpush.bf16.msra.mxu0 %v848
        %914 = vmatpush.bf16.msra.mxu0 %v846
        %915 = vmatpush.bf16.msra.mxu0 %v844
        %916 = vmatmul.bf16.gmra.mxu0 %v684
        %v917 = vpop.f32.mrf.mxu0
        %v918 = vadd.f32 0.0, %v917
        %v919 = vpop.f32.mrf.mxu0
        %v920 = vadd.f32 0.0, %v919
        %921 = vmatmul.bf16.gmra.mxu0 %v686
        %v922 = vpop.f32.mrf.mxu0
        %v923 = vadd.f32 0.0, %v922
        %v924 = vpop.f32.mrf.mxu0
        %v925 = vadd.f32 0.0, %v924
        %926 = vmatmul.bf16.gmra.mxu0 %v688
        %v927 = vpop.f32.mrf.mxu0
        %v928 = vadd.f32 0.0, %v927
        %v929 = vpop.f32.mrf.mxu0
        %v930 = vadd.f32 0.0, %v929
        %931 = vmatmul.bf16.gmra.mxu0 %v690
        %v932 = vpop.f32.mrf.mxu0
        %v933 = vadd.f32 0.0, %v932
        %v934 = vpop.f32.mrf.mxu0
        %v935 = vadd.f32 0.0, %v934
        %936 = vmatmul.bf16.gmra.mxu0 %v692
        %v937 = vpop.f32.mrf.mxu0
        %v938 = vadd.f32 0.0, %v937
        %v939 = vpop.f32.mrf.mxu0
        %v940 = vadd.f32 0.0, %v939
        %941 = vmatmul.bf16.gmra.mxu0 %v694
        %v942 = vpop.f32.mrf.mxu0
        %v943 = vadd.f32 0.0, %v942
        %v944 = vpop.f32.mrf.mxu0
        %v945 = vadd.f32 0.0, %v944
        %946 = vmatmul.bf16.gmra.mxu0 %v696
        %v947 = vpop.f32.mrf.mxu0
        %v948 = vadd.f32 0.0, %v947
        %v949 = vpop.f32.mrf.mxu0
        %v950 = vadd.f32 0.0, %v949
        %951 = vmatmul.bf16.gmra.mxu0 %v698
        %v952 = vpop.f32.mrf.mxu0
        %v953 = vadd.f32 0.0, %v952
        %v954 = vpop.f32.mrf.mxu0
        %v955 = vadd.f32 0.0, %v954
        %956 = vmatmul.bf16.gmra.mxu0 %v700
        %v957 = vpop.f32.mrf.mxu0
        %v958 = vadd.f32 0.0, %v957
        %v959 = vpop.f32.mrf.mxu0
        %v960 = vadd.f32 0.0, %v959
        %961 = vmatmul.bf16.gmra.mxu0 %v702
        %v962 = vpop.f32.mrf.mxu0
        %v963 = vadd.f32 0.0, %v962
        %v964 = vpop.f32.mrf.mxu0
        %v965 = vadd.f32 0.0, %v964
        %966 = vmatmul.bf16.gmra.mxu0 %v704
        %v967 = vpop.f32.mrf.mxu0
        %v968 = vadd.f32 0.0, %v967
        %v969 = vpop.f32.mrf.mxu0
        %v970 = vadd.f32 0.0, %v969
        %971 = vmatmul.bf16.gmra.mxu0 %v706
        %v972 = vpop.f32.mrf.mxu0
        %v973 = vadd.f32 0.0, %v972
        %v974 = vpop.f32.mrf.mxu0
        %v975 = vadd.f32 0.0, %v974
        %976 = vmatmul.bf16.gmra.mxu0 %v708
        %v977 = vpop.f32.mrf.mxu0
        %v978 = vadd.f32 0.0, %v977
        %v979 = vpop.f32.mrf.mxu0
        %v980 = vadd.f32 0.0, %v979
        %981 = vmatmul.bf16.gmra.mxu0 %v710
        %v982 = vpop.f32.mrf.mxu0
        %v983 = vadd.f32 0.0, %v982
        %v984 = vpop.f32.mrf.mxu0
        %v985 = vadd.f32 0.0, %v984
        %986 = vmatmul.bf16.gmra.mxu0 %v712
        %v987 = vpop.f32.mrf.mxu0
        %v988 = vadd.f32 0.0, %v987
        %v989 = vpop.f32.mrf.mxu0
        %v990 = vadd.f32 0.0, %v989
        %991 = vmatmul.bf16.gmra.mxu0 %v714
        %v992 = vpop.f32.mrf.mxu0
        %v993 = vadd.f32 0.0, %v992
        %v994 = vpop.f32.mrf.mxu0
        %v995 = vadd.f32 0.0, %v994
        %996 = vdwg.mxu0
        %997 = vmatpush.bf16.msra.mxu0 %v874
        %998 = vmatpush.bf16.msra.mxu0 %v872
        %999 = vmatpush.bf16.msra.mxu0 %v870
        %1000 = vmatpush.bf16.msra.mxu0 %v868
        %1001 = vmatpush.bf16.msra.mxu0 %v866
        %1002 = vmatpush.bf16.msra.mxu0 %v864
        %1003 = vmatpush.bf16.msra.mxu0 %v862
        %1004 = vmatpush.bf16.msra.mxu0 %v860
        %1005 = vmatmul.bf16.gmra.mxu0 %v685
        %v1006 = vpop.f32.mrf.mxu0
        %v1007 = vadd.f32 %v918, %v1006
        %v1008 = vpop.f32.mrf.mxu0
        %v1009 = vadd.f32 %v920, %v1008
        %1010 = vmatmul.bf16.gmra.mxu0 %v687
        %v1011 = vpop.f32.mrf.mxu0
        %v1012 = vadd.f32 %v923, %v1011
        %v1013 = vpop.f32.mrf.mxu0
        %v1014 = vadd.f32 %v925, %v1013
        %1015 = vmatmul.bf16.gmra.mxu0 %v689
        %v1016 = vpop.f32.mrf.mxu0
        %v1017 = vadd.f32 %v928, %v1016
        %v1018 = vpop.f32.mrf.mxu0
        %v1019 = vadd.f32 %v930, %v1018
        %1020 = vmatmul.bf16.gmra.mxu0 %v691
        %v1021 = vpop.f32.mrf.mxu0
        %v1022 = vadd.f32 %v933, %v1021
        %v1023 = vpop.f32.mrf.mxu0
        %v1024 = vadd.f32 %v935, %v1023
        %1025 = vmatmul.bf16.gmra.mxu0 %v693
        %v1026 = vpop.f32.mrf.mxu0
        %v1027 = vadd.f32 %v938, %v1026
        %v1028 = vpop.f32.mrf.mxu0
        %v1029 = vadd.f32 %v940, %v1028
        %1030 = vmatmul.bf16.gmra.mxu0 %v695
        %v1031 = vpop.f32.mrf.mxu0
        %v1032 = vadd.f32 %v943, %v1031
        %v1033 = vpop.f32.mrf.mxu0
        %v1034 = vadd.f32 %v945, %v1033
        %1035 = vmatmul.bf16.gmra.mxu0 %v697
        %v1036 = vpop.f32.mrf.mxu0
        %v1037 = vadd.f32 %v948, %v1036
        %v1038 = vpop.f32.mrf.mxu0
        %v1039 = vadd.f32 %v950, %v1038
        %1040 = vmatmul.bf16.gmra.mxu0 %v699
        %v1041 = vpop.f32.mrf.mxu0
        %v1042 = vadd.f32 %v953, %v1041
        %v1043 = vpop.f32.mrf.mxu0
        %v1044 = vadd.f32 %v955, %v1043
        %1045 = vmatmul.bf16.gmra.mxu0 %v701
        %v1046 = vpop.f32.mrf.mxu0
        %v1047 = vadd.f32 %v958, %v1046
        %v1048 = vpop.f32.mrf.mxu0
        %v1049 = vadd.f32 %v960, %v1048
        %1050 = vmatmul.bf16.gmra.mxu0 %v703
        %v1051 = vpop.f32.mrf.mxu0
        %v1052 = vadd.f32 %v963, %v1051
        %v1053 = vpop.f32.mrf.mxu0
        %v1054 = vadd.f32 %v965, %v1053
        %1055 = vmatmul.bf16.gmra.mxu0 %v705
        %v1056 = vpop.f32.mrf.mxu0
        %v1057 = vadd.f32 %v968, %v1056
        %v1058 = vpop.f32.mrf.mxu0
        %v1059 = vadd.f32 %v970, %v1058
        %1060 = vmatmul.bf16.gmra.mxu0 %v707
        %v1061 = vpop.f32.mrf.mxu0
        %v1062 = vadd.f32 %v973, %v1061
        %v1063 = vpop.f32.mrf.mxu0
        %v1064 = vadd.f32 %v975, %v1063
        %1065 = vmatmul.bf16.gmra.mxu0 %v709
        %v1066 = vpop.f32.mrf.mxu0
        %v1067 = vadd.f32 %v978, %v1066
        %v1068 = vpop.f32.mrf.mxu0
        %v1069 = vadd.f32 %v980, %v1068
        %1070 = vmatmul.bf16.gmra.mxu0 %v711
        %v1071 = vpop.f32.mrf.mxu0
        %v1072 = vadd.f32 %v983, %v1071
        %v1073 = vpop.f32.mrf.mxu0
        %v1074 = vadd.f32 %v985, %v1073
        %1075 = vmatmul.bf16.gmra.mxu0 %v713
        %v1076 = vpop.f32.mrf.mxu0
        %v1077 = vadd.f32 %v988, %v1076
        %v1078 = vpop.f32.mrf.mxu0
        %v1079 = vadd.f32 %v990, %v1078
        %1080 = vmatmul.bf16.gmra.mxu0 %v715
        %v1081 = vpop.f32.mrf.mxu0
        %v1082 = vadd.f32 %v993, %v1081
        %v1083 = vpop.f32.mrf.mxu0
        %v1084 = vadd.f32 %v995, %v1083
        %1085 = vdwg.mxu0
        %1086 = vmatpush.bf16.msra.mxu0 %v859
        %1087 = vmatpush.bf16.msra.mxu0 %v857
        %1088 = vmatpush.bf16.msra.mxu0 %v855
        %1089 = vmatpush.bf16.msra.mxu0 %v853
        %1090 = vmatpush.bf16.msra.mxu0 %v851
        %1091 = vmatpush.bf16.msra.mxu0 %v849
        %1092 = vmatpush.bf16.msra.mxu0 %v847
        %1093 = vmatpush.bf16.msra.mxu0 %v845
        %1094 = vmatmul.bf16.gmra.mxu0 %v684
        %v1095 = vpop.f32.mrf.mxu0
        %v1096 = vadd.f32 0.0, %v1095
        %v1097 = vpop.f32.mrf.mxu0
        %v1098 = vadd.f32 0.0, %v1097
        %1099 = vmatmul.bf16.gmra.mxu0 %v686
        %v1100 = vpop.f32.mrf.mxu0
        %v1101 = vadd.f32 0.0, %v1100
        %v1102 = vpop.f32.mrf.mxu0
        %v1103 = vadd.f32 0.0, %v1102
        %1104 = vmatmul.bf16.gmra.mxu0 %v688
        %v1105 = vpop.f32.mrf.mxu0
        %v1106 = vadd.f32 0.0, %v1105
        %v1107 = vpop.f32.mrf.mxu0
        %v1108 = vadd.f32 0.0, %v1107
        %1109 = vmatmul.bf16.gmra.mxu0 %v690
        %v1110 = vpop.f32.mrf.mxu0
        %v1111 = vadd.f32 0.0, %v1110
        %v1112 = vpop.f32.mrf.mxu0
        %v1113 = vadd.f32 0.0, %v1112
        %1114 = vmatmul.bf16.gmra.mxu0 %v692
        %v1115 = vpop.f32.mrf.mxu0
        %v1116 = vadd.f32 0.0, %v1115
        %v1117 = vpop.f32.mrf.mxu0
        %v1118 = vadd.f32 0.0, %v1117
        %1119 = vmatmul.bf16.gmra.mxu0 %v694
        %v1120 = vpop.f32.mrf.mxu0
        %v1121 = vadd.f32 0.0, %v1120
        %v1122 = vpop.f32.mrf.mxu0
        %v1123 = vadd.f32 0.0, %v1122
        %1124 = vmatmul.bf16.gmra.mxu0 %v696
        %v1125 = vpop.f32.mrf.mxu0
        %v1126 = vadd.f32 0.0, %v1125
        %v1127 = vpop.f32.mrf.mxu0
        %v1128 = vadd.f32 0.0, %v1127
        %1129 = vmatmul.bf16.gmra.mxu0 %v698
        %v1130 = vpop.f32.mrf.mxu0
        %v1131 = vadd.f32 0.0, %v1130
        %v1132 = vpop.f32.mrf.mxu0
        %v1133 = vadd.f32 0.0, %v1132
        %1134 = vmatmul.bf16.gmra.mxu0 %v700
        %v1135 = vpop.f32.mrf.mxu0
        %v1136 = vadd.f32 0.0, %v1135
        %v1137 = vpop.f32.mrf.mxu0
        %v1138 = vadd.f32 0.0, %v1137
        %1139 = vmatmul.bf16.gmra.mxu0 %v702
        %v1140 = vpop.f32.mrf.mxu0
        %v1141 = vadd.f32 0.0, %v1140
        %v1142 = vpop.f32.mrf.mxu0
        %v1143 = vadd.f32 0.0, %v1142
        %1144 = vmatmul.bf16.gmra.mxu0 %v704
        %v1145 = vpop.f32.mrf.mxu0
        %v1146 = vadd.f32 0.0, %v1145
        %v1147 = vpop.f32.mrf.mxu0
        %v1148 = vadd.f32 0.0, %v1147
        %1149 = vmatmul.bf16.gmra.mxu0 %v706
        %v1150 = vpop.f32.mrf.mxu0
        %v1151 = vadd.f32 0.0, %v1150
        %v1152 = vpop.f32.mrf.mxu0
        %v1153 = vadd.f32 0.0, %v1152
        %1154 = vmatmul.bf16.gmra.mxu0 %v708
        %v1155 = vpop.f32.mrf.mxu0
        %v1156 = vadd.f32 0.0, %v1155
        %v1157 = vpop.f32.mrf.mxu0
        %v1158 = vadd.f32 0.0, %v1157
        %1159 = vmatmul.bf16.gmra.mxu0 %v710
        %v1160 = vpop.f32.mrf.mxu0
        %v1161 = vadd.f32 0.0, %v1160
        %v1162 = vpop.f32.mrf.mxu0
        %v1163 = vadd.f32 0.0, %v1162
        %1164 = vmatmul.bf16.gmra.mxu0 %v712
        %v1165 = vpop.f32.mrf.mxu0
        %v1166 = vadd.f32 0.0, %v1165
        %v1167 = vpop.f32.mrf.mxu0
        %v1168 = vadd.f32 0.0, %v1167
        %1169 = vmatmul.bf16.gmra.mxu0 %v714
        %v1170 = vpop.f32.mrf.mxu0
        %v1171 = vadd.f32 0.0, %v1170
        %v1172 = vpop.f32.mrf.mxu0
        %v1173 = vadd.f32 0.0, %v1172
        %1174 = vdwg.mxu0
        %1175 = vmatpush.bf16.msra.mxu0 %v875
        %1176 = vmatpush.bf16.msra.mxu0 %v873
        %1177 = vmatpush.bf16.msra.mxu0 %v871
        %1178 = vmatpush.bf16.msra.mxu0 %v869
        %1179 = vmatpush.bf16.msra.mxu0 %v867
        %1180 = vmatpush.bf16.msra.mxu0 %v865
        %1181 = vmatpush.bf16.msra.mxu0 %v863
        %1182 = vmatpush.bf16.msra.mxu0 %v861
        %1183 = vmatmul.bf16.gmra.mxu0 %v685
        %v1184 = vpop.f32.mrf.mxu0
        %v1185 = vadd.f32 %v1096, %v1184
        %v1186 = vpop.f32.mrf.mxu0
        %v1187 = vadd.f32 %v1098, %v1186
        %1188 = vmatmul.bf16.gmra.mxu0 %v687
        %v1189 = vpop.f32.mrf.mxu0
        %v1190 = vadd.f32 %v1101, %v1189
        %v1191 = vpop.f32.mrf.mxu0
        %v1192 = vadd.f32 %v1103, %v1191
        %1193 = vmatmul.bf16.gmra.mxu0 %v689
        %v1194 = vpop.f32.mrf.mxu0
        %v1195 = vadd.f32 %v1106, %v1194
        %v1196 = vpop.f32.mrf.mxu0
        %v1197 = vadd.f32 %v1108, %v1196
        %1198 = vmatmul.bf16.gmra.mxu0 %v691
        %v1199 = vpop.f32.mrf.mxu0
        %v1200 = vadd.f32 %v1111, %v1199
        %v1201 = vpop.f32.mrf.mxu0
        %v1202 = vadd.f32 %v1113, %v1201
        %1203 = vmatmul.bf16.gmra.mxu0 %v693
        %v1204 = vpop.f32.mrf.mxu0
        %v1205 = vadd.f32 %v1116, %v1204
        %v1206 = vpop.f32.mrf.mxu0
        %v1207 = vadd.f32 %v1118, %v1206
        %1208 = vmatmul.bf16.gmra.mxu0 %v695
        %v1209 = vpop.f32.mrf.mxu0
        %v1210 = vadd.f32 %v1121, %v1209
        %v1211 = vpop.f32.mrf.mxu0
        %v1212 = vadd.f32 %v1123, %v1211
        %1213 = vmatmul.bf16.gmra.mxu0 %v697
        %v1214 = vpop.f32.mrf.mxu0
        %v1215 = vadd.f32 %v1126, %v1214
        %v1216 = vpop.f32.mrf.mxu0
        %v1217 = vadd.f32 %v1128, %v1216
        %1218 = vmatmul.bf16.gmra.mxu0 %v699
        %v1219 = vpop.f32.mrf.mxu0
        %v1220 = vadd.f32 %v1131, %v1219
        %v1221 = vpop.f32.mrf.mxu0
        %v1222 = vadd.f32 %v1133, %v1221
        %1223 = vmatmul.bf16.gmra.mxu0 %v701
        %v1224 = vpop.f32.mrf.mxu0
        %v1225 = vadd.f32 %v1136, %v1224
        %v1226 = vpop.f32.mrf.mxu0
        %v1227 = vadd.f32 %v1138, %v1226
        %1228 = vmatmul.bf16.gmra.mxu0 %v703
        %v1229 = vpop.f32.mrf.mxu0
        %v1230 = vadd.f32 %v1141, %v1229
        %v1231 = vpop.f32.mrf.mxu0
        %v1232 = vadd.f32 %v1143, %v1231
        %1233 = vmatmul.bf16.gmra.mxu0 %v705
        %v1234 = vpop.f32.mrf.mxu0
        %v1235 = vadd.f32 %v1146, %v1234
        %v1236 = vpop.f32.mrf.mxu0
        %v1237 = vadd.f32 %v1148, %v1236
        %1238 = vmatmul.bf16.gmra.mxu0 %v707
        %v1239 = vpop.f32.mrf.mxu0
        %v1240 = vadd.f32 %v1151, %v1239
        %v1241 = vpop.f32.mrf.mxu0
        %v1242 = vadd.f32 %v1153, %v1241
        %1243 = vmatmul.bf16.gmra.mxu0 %v709
        %v1244 = vpop.f32.mrf.mxu0
        %v1245 = vadd.f32 %v1156, %v1244
        %v1246 = vpop.f32.mrf.mxu0
        %v1247 = vadd.f32 %v1158, %v1246
        %1248 = vmatmul.bf16.gmra.mxu0 %v711
        %v1249 = vpop.f32.mrf.mxu0
        %v1250 = vadd.f32 %v1161, %v1249
        %v1251 = vpop.f32.mrf.mxu0
        %v1252 = vadd.f32 %v1163, %v1251
        %1253 = vmatmul.bf16.gmra.mxu0 %v713
        %v1254 = vpop.f32.mrf.mxu0
        %v1255 = vadd.f32 %v1166, %v1254
        %v1256 = vpop.f32.mrf.mxu0
        %v1257 = vadd.f32 %v1168, %v1256
        %1258 = vmatmul.bf16.gmra.mxu0 %v715
        %v1259 = vpop.f32.mrf.mxu0
        %v1260 = vadd.f32 %v1171, %v1259
        %v1261 = vpop.f32.mrf.mxu0
        %v1262 = vadd.f32 %v1173, %v1261
        %1263 = vdwg.mxu0
        %v1264 = vadd.f32 %v460, %v1007
        %v1265 = vadd.f32 %v461, %v1185
        %v1266 = vadd.f32 %v462, %v1009
        %v1267 = vadd.f32 %v463, %v1187
        %v1268 = vadd.f32 %v464, %v1012
        %v1269 = vadd.f32 %v465, %v1190
        %v1270 = vadd.f32 %v466, %v1014
        %v1271 = vadd.f32 %v467, %v1192
        %v1272 = vadd.f32 %v468, %v1017
        %v1273 = vadd.f32 %v469, %v1195
        %v1274 = vadd.f32 %v470, %v1019
        %v1275 = vadd.f32 %v471, %v1197
        %v1276 = vadd.f32 %v472, %v1022
        %v1277 = vadd.f32 %v473, %v1200
        %v1278 = vadd.f32 %v474, %v1024
        %v1279 = vadd.f32 %v475, %v1202
        %v1280 = vadd.f32 %v476, %v1027
        %v1281 = vadd.f32 %v477, %v1205
        %v1282 = vadd.f32 %v478, %v1029
        %v1283 = vadd.f32 %v479, %v1207
        %v1284 = vadd.f32 %v480, %v1032
        %v1285 = vadd.f32 %v481, %v1210
        %v1286 = vadd.f32 %v482, %v1034
        %v1287 = vadd.f32 %v483, %v1212
        %v1288 = vadd.f32 %v484, %v1037
        %v1289 = vadd.f32 %v485, %v1215
        %v1290 = vadd.f32 %v486, %v1039
        %v1291 = vadd.f32 %v487, %v1217
        %v1292 = vadd.f32 %v488, %v1042
        %v1293 = vadd.f32 %v489, %v1220
        %v1294 = vadd.f32 %v490, %v1044
        %v1295 = vadd.f32 %v491, %v1222
        %v1296 = vadd.f32 %v492, %v1047
        %v1297 = vadd.f32 %v493, %v1225
        %v1298 = vadd.f32 %v494, %v1049
        %v1299 = vadd.f32 %v495, %v1227
        %v1300 = vadd.f32 %v496, %v1052
        %v1301 = vadd.f32 %v497, %v1230
        %v1302 = vadd.f32 %v498, %v1054
        %v1303 = vadd.f32 %v499, %v1232
        %v1304 = vadd.f32 %v500, %v1057
        %v1305 = vadd.f32 %v501, %v1235
        %v1306 = vadd.f32 %v502, %v1059
        %v1307 = vadd.f32 %v503, %v1237
        %v1308 = vadd.f32 %v504, %v1062
        %v1309 = vadd.f32 %v505, %v1240
        %v1310 = vadd.f32 %v506, %v1064
        %v1311 = vadd.f32 %v507, %v1242
        %v1312 = vadd.f32 %v508, %v1067
        %v1313 = vadd.f32 %v509, %v1245
        %v1314 = vadd.f32 %v510, %v1069
        %v1315 = vadd.f32 %v511, %v1247
        %v1316 = vadd.f32 %v512, %v1072
        %v1317 = vadd.f32 %v513, %v1250
        %v1318 = vadd.f32 %v514, %v1074
        %v1319 = vadd.f32 %v515, %v1252
        %v1320 = vadd.f32 %v516, %v1077
        %v1321 = vadd.f32 %v517, %v1255
        %v1322 = vadd.f32 %v518, %v1079
        %v1323 = vadd.f32 %v519, %v1257
        %v1324 = vadd.f32 %v520, %v1082
        %v1325 = vadd.f32 %v521, %v1260
        %v1326 = vadd.f32 %v522, %v1084
        %v1327 = vadd.f32 %v523, %v1262
        %1328 = vst [vmem:[%s377] sm:$0xff] %v1264
        %1329 = vst [vmem:[%s377 + $0x8] sm:$0xff] %v1265
        %1330 = vst [vmem:[%s377 + $0x10] sm:$0xff] %v1266
        %1331 = vst [vmem:[%s377 + $0x18] sm:$0xff] %v1267
        %1332 = vst [vmem:[%s377 + $0x20] sm:$0xff] %v1268
        %1333 = vst [vmem:[%s377 + $0x28] sm:$0xff] %v1269
        %1334 = vst [vmem:[%s377 + $0x30] sm:$0xff] %v1270
        %1335 = vst [vmem:[%s377 + $0x38] sm:$0xff] %v1271
        %1336 = vst [vmem:[%s377 + $0x40] sm:$0xff] %v1272
        %1337 = vst [vmem:[%s377 + $0x48] sm:$0xff] %v1273
        %1338 = vst [vmem:[%s377 + $0x50] sm:$0xff] %v1274
        %1339 = vst [vmem:[%s377 + $0x58] sm:$0xff] %v1275
        %1340 = vst [vmem:[%s377 + $0x60] sm:$0xff] %v1276
        %1341 = vst [vmem:[%s377 + $0x68] sm:$0xff] %v1277
        %1342 = vst [vmem:[%s377 + $0x70] sm:$0xff] %v1278
        %1343 = vst [vmem:[%s377 + $0x78] sm:$0xff] %v1279
        %1344 = vst [vmem:[%s377 + $0x80] sm:$0xff] %v1280
        %1345 = vst [vmem:[%s377 + $0x88] sm:$0xff] %v1281
        %1346 = vst [vmem:[%s377 + $0x90] sm:$0xff] %v1282
        %1347 = vst [vmem:[%s377 + $0x98] sm:$0xff] %v1283
        %1348 = vst [vmem:[%s377 + $0xa0] sm:$0xff] %v1284
        %1349 = vst [vmem:[%s377 + $0xa8] sm:$0xff] %v1285
        %1350 = vst [vmem:[%s377 + $0xb0] sm:$0xff] %v1286
        %1351 = vst [vmem:[%s377 + $0xb8] sm:$0xff] %v1287
        %1352 = vst [vmem:[%s377 + $0xc0] sm:$0xff] %v1288
        %1353 = vst [vmem:[%s377 + $0xc8] sm:$0xff] %v1289
        %1354 = vst [vmem:[%s377 + $0xd0] sm:$0xff] %v1290
        %1355 = vst [vmem:[%s377 + $0xd8] sm:$0xff] %v1291
        %1356 = vst [vmem:[%s377 + $0xe0] sm:$0xff] %v1292
        %1357 = vst [vmem:[%s377 + $0xe8] sm:$0xff] %v1293
        %1358 = vst [vmem:[%s377 + $0xf0] sm:$0xff] %v1294
        %1359 = vst [vmem:[%s377 + $0xf8] sm:$0xff] %v1295
        %1360 = vst [vmem:[%s377 + $0x100] sm:$0xff] %v1296
        %1361 = vst [vmem:[%s377 + $0x108] sm:$0xff] %v1297
        %1362 = vst [vmem:[%s377 + $0x110] sm:$0xff] %v1298
        %1363 = vst [vmem:[%s377 + $0x118] sm:$0xff] %v1299
        %1364 = vst [vmem:[%s377 + $0x120] sm:$0xff] %v1300
        %1365 = vst [vmem:[%s377 + $0x128] sm:$0xff] %v1301
        %1366 = vst [vmem:[%s377 + $0x130] sm:$0xff] %v1302
        %1367 = vst [vmem:[%s377 + $0x138] sm:$0xff] %v1303
        %1368 = vst [vmem:[%s377 + $0x140] sm:$0xff] %v1304
        %1369 = vst [vmem:[%s377 + $0x148] sm:$0xff] %v1305
        %1370 = vst [vmem:[%s377 + $0x150] sm:$0xff] %v1306
        %1371 = vst [vmem:[%s377 + $0x158] sm:$0xff] %v1307
        %1372 = vst [vmem:[%s377 + $0x160] sm:$0xff] %v1308
        %1373 = vst [vmem:[%s377 + $0x168] sm:$0xff] %v1309
        %1374 = vst [vmem:[%s377 + $0x170] sm:$0xff] %v1310
        %1375 = vst [vmem:[%s377 + $0x178] sm:$0xff] %v1311
        %1376 = vst [vmem:[%s377 + $0x180] sm:$0xff] %v1312
        %1377 = vst [vmem:[%s377 + $0x188] sm:$0xff] %v1313
        %1378 = vst [vmem:[%s377 + $0x190] sm:$0xff] %v1314
        %1379 = vst [vmem:[%s377 + $0x198] sm:$0xff] %v1315
        %1380 = vst [vmem:[%s377 + $0x1a0] sm:$0xff] %v1316
        %1381 = vst [vmem:[%s377 + $0x1a8] sm:$0xff] %v1317
        %1382 = vst [vmem:[%s377 + $0x1b0] sm:$0xff] %v1318
        %1383 = vst [vmem:[%s377 + $0x1b8] sm:$0xff] %v1319
        %1384 = vst [vmem:[%s377 + $0x1c0] sm:$0xff] %v1320
        %1385 = vst [vmem:[%s377 + $0x1c8] sm:$0xff] %v1321
        %1386 = vst [vmem:[%s377 + $0x1d0] sm:$0xff] %v1322
        %1387 = vst [vmem:[%s377 + $0x1d8] sm:$0xff] %v1323
        %1388 = vst [vmem:[%s377 + $0x1e0] sm:$0xff] %v1324
        %1389 = vst [vmem:[%s377 + $0x1e8] sm:$0xff] %v1325
        %1390 = vst [vmem:[%s377 + $0x1f0] sm:$0xff] %v1326
        %1391 = vst [vmem:[%s377 + $0x1f8] sm:$0xff] %v1327
        %p1392 = scmp.eq.s32.totalorder %s32, 1
        // Predicated region
        $region57: #{tpu_custom_call.1} parent=39 // pred_check
          %p1393 = pneg %p1392
        $region58: #{tpu_custom_call.1} parent=39 // pred_check_branch
          %1395 = sbr.rel (%p1393) target = $region60
        $region59: #{tpu_custom_call.1} parent=39 // pred_region
          %s1396 = smul.u32 %s31, 256
          %s1397 = sshra.s32 %s1396, 7
          %s1398 = sand.u32 %s1396, 127
          %s1399 = scalar_lea.vmem %s1, %s1397
          %v1400 = vld [vmem:[%s1399] sm:$0x3]
          %v1401 = vld [vmem:[%s377] sm:$0xff]
          %v1402 = vld [vmem:[%s377 + $0x8] sm:$0xff]
          %v1403 = vld [vmem:[%s377 + $0x10] sm:$0xff]
          %v1404 = vld [vmem:[%s377 + $0x18] sm:$0xff]
          %v1405 = vld [vmem:[%s377 + $0x20] sm:$0xff]
          %v1406 = vld [vmem:[%s377 + $0x28] sm:$0xff]
          %v1407 = vld [vmem:[%s377 + $0x30] sm:$0xff]
          %v1408 = vld [vmem:[%s377 + $0x38] sm:$0xff]
          %v1409 = vld [vmem:[%s377 + $0x40] sm:$0xff]
          %v1410 = vld [vmem:[%s377 + $0x48] sm:$0xff]
          %v1411 = vld [vmem:[%s377 + $0x50] sm:$0xff]
          %v1412 = vld [vmem:[%s377 + $0x58] sm:$0xff]
          %v1413 = vld [vmem:[%s377 + $0x60] sm:$0xff]
          %v1414 = vld [vmem:[%s377 + $0x68] sm:$0xff]
          %v1415 = vld [vmem:[%s377 + $0x70] sm:$0xff]
          %v1416 = vld [vmem:[%s377 + $0x78] sm:$0xff]
          %v1417 = vld [vmem:[%s377 + $0x80] sm:$0xff]
          %v1418 = vld [vmem:[%s377 + $0x88] sm:$0xff]
          %v1419 = vld [vmem:[%s377 + $0x90] sm:$0xff]
          %v1420 = vld [vmem:[%s377 + $0x98] sm:$0xff]
          %v1421 = vld [vmem:[%s377 + $0xa0] sm:$0xff]
          %v1422 = vld [vmem:[%s377 + $0xa8] sm:$0xff]
          %v1423 = vld [vmem:[%s377 + $0xb0] sm:$0xff]
          %v1424 = vld [vmem:[%s377 + $0xb8] sm:$0xff]
          %v1425 = vld [vmem:[%s377 + $0xc0] sm:$0xff]
          %v1426 = vld [vmem:[%s377 + $0xc8] sm:$0xff]
          %v1427 = vld [vmem:[%s377 + $0xd0] sm:$0xff]
          %v1428 = vld [vmem:[%s377 + $0xd8] sm:$0xff]
          %v1429 = vld [vmem:[%s377 + $0xe0] sm:$0xff]
          %v1430 = vld [vmem:[%s377 + $0xe8] sm:$0xff]
          %v1431 = vld [vmem:[%s377 + $0xf0] sm:$0xff]
          %v1432 = vld [vmem:[%s377 + $0xf8] sm:$0xff]
          %v1433 = vld [vmem:[%s377 + $0x100] sm:$0xff]
          %v1434 = vld [vmem:[%s377 + $0x108] sm:$0xff]
          %v1435 = vld [vmem:[%s377 + $0x110] sm:$0xff]
          %v1436 = vld [vmem:[%s377 + $0x118] sm:$0xff]
          %v1437 = vld [vmem:[%s377 + $0x120] sm:$0xff]
          %v1438 = vld [vmem:[%s377 + $0x128] sm:$0xff]
          %v1439 = vld [vmem:[%s377 + $0x130] sm:$0xff]
          %v1440 = vld [vmem:[%s377 + $0x138] sm:$0xff]
          %v1441 = vld [vmem:[%s377 + $0x140] sm:$0xff]
          %v1442 = vld [vmem:[%s377 + $0x148] sm:$0xff]
          %v1443 = vld [vmem:[%s377 + $0x150] sm:$0xff]
          %v1444 = vld [vmem:[%s377 + $0x158] sm:$0xff]
          %v1445 = vld [vmem:[%s377 + $0x160] sm:$0xff]
          %v1446 = vld [vmem:[%s377 + $0x168] sm:$0xff]
          %v1447 = vld [vmem:[%s377 + $0x170] sm:$0xff]
          %v1448 = vld [vmem:[%s377 + $0x178] sm:$0xff]
          %v1449 = vld [vmem:[%s377 + $0x180] sm:$0xff]
          %v1450 = vld [vmem:[%s377 + $0x188] sm:$0xff]
          %v1451 = vld [vmem:[%s377 + $0x190] sm:$0xff]
          %v1452 = vld [vmem:[%s377 + $0x198] sm:$0xff]
          %v1453 = vld [vmem:[%s377 + $0x1a0] sm:$0xff]
          %v1454 = vld [vmem:[%s377 + $0x1a8] sm:$0xff]
          %v1455 = vld [vmem:[%s377 + $0x1b0] sm:$0xff]
          %v1456 = vld [vmem:[%s377 + $0x1b8] sm:$0xff]
          %v1457 = vld [vmem:[%s377 + $0x1c0] sm:$0xff]
          %v1458 = vld [vmem:[%s377 + $0x1c8] sm:$0xff]
          %v1459 = vld [vmem:[%s377 + $0x1d0] sm:$0xff]
          %v1460 = vld [vmem:[%s377 + $0x1d8] sm:$0xff]
          %v1461 = vld [vmem:[%s377 + $0x1e0] sm:$0xff]
          %v1462 = vld [vmem:[%s377 + $0x1e8] sm:$0xff]
          %v1463 = vld [vmem:[%s377 + $0x1f0] sm:$0xff]
          %v1464 = vld [vmem:[%s377 + $0x1f8] sm:$0xff]
          %v1465 = vld [vmem:[%s335] sm:$0xff]
          %v1466 = vld [vmem:[%s335 + $0x8] sm:$0xff]
          %v1467 = vld [vmem:[%s335 + $0x10] sm:$0xff]
          %v1468 = vld [vmem:[%s335 + $0x18] sm:$0xff]
          %v1469 = vld [vmem:[%s335 + $0x20] sm:$0xff]
          %v1470 = vld [vmem:[%s335 + $0x28] sm:$0xff]
          %v1471 = vld [vmem:[%s335 + $0x30] sm:$0xff]
          %v1472 = vld [vmem:[%s335 + $0x38] sm:$0xff]
          %v1473 = vld [vmem:[%s335 + $0x40] sm:$0xff]
          %v1474 = vld [vmem:[%s335 + $0x48] sm:$0xff]
          %v1475 = vld [vmem:[%s335 + $0x50] sm:$0xff]
          %v1476 = vld [vmem:[%s335 + $0x58] sm:$0xff]
          %v1477 = vld [vmem:[%s335 + $0x60] sm:$0xff]
          %v1478 = vld [vmem:[%s335 + $0x68] sm:$0xff]
          %v1479 = vld [vmem:[%s335 + $0x70] sm:$0xff]
          %v1480 = vld [vmem:[%s335 + $0x78] sm:$0xff]
          %v1481 = vld [vmem:[%s335 + $0x80] sm:$0xff]
          %v1482 = vld [vmem:[%s335 + $0x88] sm:$0xff]
          %v1483 = vld [vmem:[%s335 + $0x90] sm:$0xff]
          %v1484 = vld [vmem:[%s335 + $0x98] sm:$0xff]
          %v1485 = vld [vmem:[%s335 + $0xa0] sm:$0xff]
          %v1486 = vld [vmem:[%s335 + $0xa8] sm:$0xff]
          %v1487 = vld [vmem:[%s335 + $0xb0] sm:$0xff]
          %v1488 = vld [vmem:[%s335 + $0xb8] sm:$0xff]
          %v1489 = vld [vmem:[%s335 + $0xc0] sm:$0xff]
          %v1490 = vld [vmem:[%s335 + $0xc8] sm:$0xff]
          %v1491 = vld [vmem:[%s335 + $0xd0] sm:$0xff]
          %v1492 = vld [vmem:[%s335 + $0xd8] sm:$0xff]
          %v1493 = vld [vmem:[%s335 + $0xe0] sm:$0xff]
          %v1494 = vld [vmem:[%s335 + $0xe8] sm:$0xff]
          %v1495 = vld [vmem:[%s335 + $0xf0] sm:$0xff]
          %v1496 = vld [vmem:[%s335 + $0xf8] sm:$0xff]
          %v1497 = vld [vmem:[%s335 + $0x100] sm:$0xff]
          %v1498 = vld [vmem:[%s335 + $0x108] sm:$0xff]
          %v1499 = vld [vmem:[%s335 + $0x110] sm:$0xff]
          %v1500 = vld [vmem:[%s335 + $0x118] sm:$0xff]
          %v1501 = vld [vmem:[%s335 + $0x120] sm:$0xff]
          %v1502 = vld [vmem:[%s335 + $0x128] sm:$0xff]
          %v1503 = vld [vmem:[%s335 + $0x130] sm:$0xff]
          %v1504 = vld [vmem:[%s335 + $0x138] sm:$0xff]
          %v1505 = vld [vmem:[%s335 + $0x140] sm:$0xff]
          %v1506 = vld [vmem:[%s335 + $0x148] sm:$0xff]
          %v1507 = vld [vmem:[%s335 + $0x150] sm:$0xff]
          %v1508 = vld [vmem:[%s335 + $0x158] sm:$0xff]
          %v1509 = vld [vmem:[%s335 + $0x160] sm:$0xff]
          %v1510 = vld [vmem:[%s335 + $0x168] sm:$0xff]
          %v1511 = vld [vmem:[%s335 + $0x170] sm:$0xff]
          %v1512 = vld [vmem:[%s335 + $0x178] sm:$0xff]
          %v1513 = vld [vmem:[%s335 + $0x180] sm:$0xff]
          %v1514 = vld [vmem:[%s335 + $0x188] sm:$0xff]
          %v1515 = vld [vmem:[%s335 + $0x190] sm:$0xff]
          %v1516 = vld [vmem:[%s335 + $0x198] sm:$0xff]
          %v1517 = vld [vmem:[%s335 + $0x1a0] sm:$0xff]
          %v1518 = vld [vmem:[%s335 + $0x1a8] sm:$0xff]
          %v1519 = vld [vmem:[%s335 + $0x1b0] sm:$0xff]
          %v1520 = vld [vmem:[%s335 + $0x1b8] sm:$0xff]
          %v1521 = vld [vmem:[%s335 + $0x1c0] sm:$0xff]
          %v1522 = vld [vmem:[%s335 + $0x1c8] sm:$0xff]
          %v1523 = vld [vmem:[%s335 + $0x1d0] sm:$0xff]
          %v1524 = vld [vmem:[%s335 + $0x1d8] sm:$0xff]
          %v1525 = vld [vmem:[%s335 + $0x1e0] sm:$0xff]
          %v1526 = vld [vmem:[%s335 + $0x1e8] sm:$0xff]
          %v1527 = vld [vmem:[%s335 + $0x1f0] sm:$0xff]
          %v1528 = vld [vmem:[%s335 + $0x1f8] sm:$0xff]
          %v1529 = vld [vmem:[%s382] sm:$0xff]
          %v1530 = vld [vmem:[%s382 + $0x8] sm:$0xff]
          %v1531 = vld [vmem:[%s382 + $0x10] sm:$0xff]
          %v1532 = vld [vmem:[%s382 + $0x18] sm:$0xff]
          %v1533 = vld [vmem:[%s382 + $0x20] sm:$0xff]
          %v1534 = vld [vmem:[%s382 + $0x28] sm:$0xff]
          %v1535 = vld [vmem:[%s382 + $0x30] sm:$0xff]
          %v1536 = vld [vmem:[%s382 + $0x38] sm:$0xff]
          %v1537 = vld [vmem:[%s382 + $0x40] sm:$0xff]
          %v1538 = vld [vmem:[%s382 + $0x48] sm:$0xff]
          %v1539 = vld [vmem:[%s382 + $0x50] sm:$0xff]
          %v1540 = vld [vmem:[%s382 + $0x58] sm:$0xff]
          %v1541 = vld [vmem:[%s382 + $0x60] sm:$0xff]
          %v1542 = vld [vmem:[%s382 + $0x68] sm:$0xff]
          %v1543 = vld [vmem:[%s382 + $0x70] sm:$0xff]
          %v1544 = vld [vmem:[%s382 + $0x78] sm:$0xff]
          %v1545 = vld [vmem:[%s382 + $0x80] sm:$0xff]
          %v1546 = vld [vmem:[%s382 + $0x88] sm:$0xff]
          %v1547 = vld [vmem:[%s382 + $0x90] sm:$0xff]
          %v1548 = vld [vmem:[%s382 + $0x98] sm:$0xff]
          %v1549 = vld [vmem:[%s382 + $0xa0] sm:$0xff]
          %v1550 = vld [vmem:[%s382 + $0xa8] sm:$0xff]
          %v1551 = vld [vmem:[%s382 + $0xb0] sm:$0xff]
          %v1552 = vld [vmem:[%s382 + $0xb8] sm:$0xff]
          %v1553 = vld [vmem:[%s382 + $0xc0] sm:$0xff]
          %v1554 = vld [vmem:[%s382 + $0xc8] sm:$0xff]
          %v1555 = vld [vmem:[%s382 + $0xd0] sm:$0xff]
          %v1556 = vld [vmem:[%s382 + $0xd8] sm:$0xff]
          %v1557 = vld [vmem:[%s382 + $0xe0] sm:$0xff]
          %v1558 = vld [vmem:[%s382 + $0xe8] sm:$0xff]
          %v1559 = vld [vmem:[%s382 + $0xf0] sm:$0xff]
          %v1560 = vld [vmem:[%s382 + $0xf8] sm:$0xff]
          %1562 = vset.pattern.permute.xlu0 0
          %1563 = vperm.xlu0 %1562, %v1529
          %v1564 = vpop.permute.xlu0 %1563
          %1567 = vset.pattern.permute.xlu0 0
          %1568 = vperm.xlu0 %1567, %v1530
          %v1569 = vpop.permute.xlu0 %1568
          %1572 = vset.pattern.permute.xlu0 0
          %1573 = vperm.xlu0 %1572, %v1531
          %v1574 = vpop.permute.xlu0 %1573
          %1577 = vset.pattern.permute.xlu0 0
          %1578 = vperm.xlu0 %1577, %v1532
          %v1579 = vpop.permute.xlu0 %1578
          %1582 = vset.pattern.permute.xlu0 0
          %1583 = vperm.xlu0 %1582, %v1533
          %v1584 = vpop.permute.xlu0 %1583
          %1587 = vset.pattern.permute.xlu0 0
          %1588 = vperm.xlu0 %1587, %v1534
          %v1589 = vpop.permute.xlu0 %1588
          %1592 = vset.pattern.permute.xlu0 0
          %1593 = vperm.xlu0 %1592, %v1535
          %v1594 = vpop.permute.xlu0 %1593
          %1597 = vset.pattern.permute.xlu0 0
          %1598 = vperm.xlu0 %1597, %v1536
          %v1599 = vpop.permute.xlu0 %1598
          %1602 = vset.pattern.permute.xlu0 0
          %1603 = vperm.xlu0 %1602, %v1537
          %v1604 = vpop.permute.xlu0 %1603
          %1607 = vset.pattern.permute.xlu0 0
          %1608 = vperm.xlu0 %1607, %v1538
          %v1609 = vpop.permute.xlu0 %1608
          %1612 = vset.pattern.permute.xlu0 0
          %1613 = vperm.xlu0 %1612, %v1539
          %v1614 = vpop.permute.xlu0 %1613
          %1617 = vset.pattern.permute.xlu0 0
          %1618 = vperm.xlu0 %1617, %v1540
          %v1619 = vpop.permute.xlu0 %1618
          %1622 = vset.pattern.permute.xlu0 0
          %1623 = vperm.xlu0 %1622, %v1541
          %v1624 = vpop.permute.xlu0 %1623
          %1627 = vset.pattern.permute.xlu0 0
          %1628 = vperm.xlu0 %1627, %v1542
          %v1629 = vpop.permute.xlu0 %1628
          %1632 = vset.pattern.permute.xlu0 0
          %1633 = vperm.xlu0 %1632, %v1543
          %v1634 = vpop.permute.xlu0 %1633
          %1637 = vset.pattern.permute.xlu0 0
          %1638 = vperm.xlu0 %1637, %v1544
          %v1639 = vpop.permute.xlu0 %1638
          %1642 = vset.pattern.permute.xlu0 0
          %1643 = vperm.xlu0 %1642, %v1545
          %v1644 = vpop.permute.xlu0 %1643
          %1647 = vset.pattern.permute.xlu0 0
          %1648 = vperm.xlu0 %1647, %v1546
          %v1649 = vpop.permute.xlu0 %1648
          %1652 = vset.pattern.permute.xlu0 0
          %1653 = vperm.xlu0 %1652, %v1547
          %v1654 = vpop.permute.xlu0 %1653
          %1657 = vset.pattern.permute.xlu0 0
          %1658 = vperm.xlu0 %1657, %v1548
          %v1659 = vpop.permute.xlu0 %1658
          %1662 = vset.pattern.permute.xlu0 0
          %1663 = vperm.xlu0 %1662, %v1549
          %v1664 = vpop.permute.xlu0 %1663
          %1667 = vset.pattern.permute.xlu0 0
          %1668 = vperm.xlu0 %1667, %v1550
          %v1669 = vpop.permute.xlu0 %1668
          %1672 = vset.pattern.permute.xlu0 0
          %1673 = vperm.xlu0 %1672, %v1551
          %v1674 = vpop.permute.xlu0 %1673
          %1677 = vset.pattern.permute.xlu0 0
          %1678 = vperm.xlu0 %1677, %v1552
          %v1679 = vpop.permute.xlu0 %1678
          %1682 = vset.pattern.permute.xlu0 0
          %1683 = vperm.xlu0 %1682, %v1553
          %v1684 = vpop.permute.xlu0 %1683
          %1687 = vset.pattern.permute.xlu0 0
          %1688 = vperm.xlu0 %1687, %v1554
          %v1689 = vpop.permute.xlu0 %1688
          %1692 = vset.pattern.permute.xlu0 0
          %1693 = vperm.xlu0 %1692, %v1555
          %v1694 = vpop.permute.xlu0 %1693
          %1697 = vset.pattern.permute.xlu0 0
          %1698 = vperm.xlu0 %1697, %v1556
          %v1699 = vpop.permute.xlu0 %1698
          %1702 = vset.pattern.permute.xlu0 0
          %1703 = vperm.xlu0 %1702, %v1557
          %v1704 = vpop.permute.xlu0 %1703
          %1707 = vset.pattern.permute.xlu0 0
          %1708 = vperm.xlu0 %1707, %v1558
          %v1709 = vpop.permute.xlu0 %1708
          %1712 = vset.pattern.permute.xlu0 0
          %1713 = vperm.xlu0 %1712, %v1559
          %v1714 = vpop.permute.xlu0 %1713
          %1717 = vset.pattern.permute.xlu0 0
          %1718 = vperm.xlu0 %1717, %v1560
          %v1719 = vpop.permute.xlu0 %1718
          %v1722 = vperm.slane %v1400, 0
          %v1723 = vperm.slane %v1400, 1
          %v1726 = vadd.f32 %v1564, %v1722
          %v1727 = vadd.f32 %v1564, %v1723
          %v1728 = vadd.f32 %v1569, %v1722
          %v1729 = vadd.f32 %v1569, %v1723
          %v1730 = vadd.f32 %v1574, %v1722
          %v1731 = vadd.f32 %v1574, %v1723
          %v1732 = vadd.f32 %v1579, %v1722
          %v1733 = vadd.f32 %v1579, %v1723
          %v1734 = vadd.f32 %v1584, %v1722
          %v1735 = vadd.f32 %v1584, %v1723
          %v1736 = vadd.f32 %v1589, %v1722
          %v1737 = vadd.f32 %v1589, %v1723
          %v1738 = vadd.f32 %v1594, %v1722
          %v1739 = vadd.f32 %v1594, %v1723
          %v1740 = vadd.f32 %v1599, %v1722
          %v1741 = vadd.f32 %v1599, %v1723
          %v1742 = vadd.f32 %v1604, %v1722
          %v1743 = vadd.f32 %v1604, %v1723
          %v1744 = vadd.f32 %v1609, %v1722
          %v1745 = vadd.f32 %v1609, %v1723
          %v1746 = vadd.f32 %v1614, %v1722
          %v1747 = vadd.f32 %v1614, %v1723
          %v1748 = vadd.f32 %v1619, %v1722
          %v1749 = vadd.f32 %v1619, %v1723
          %v1750 = vadd.f32 %v1624, %v1722
          %v1751 = vadd.f32 %v1624, %v1723
          %v1752 = vadd.f32 %v1629, %v1722
          %v1753 = vadd.f32 %v1629, %v1723
          %v1754 = vadd.f32 %v1634, %v1722
          %v1755 = vadd.f32 %v1634, %v1723
          %v1756 = vadd.f32 %v1639, %v1722
          %v1757 = vadd.f32 %v1639, %v1723
          %v1758 = vadd.f32 %v1644, %v1722
          %v1759 = vadd.f32 %v1644, %v1723
          %v1760 = vadd.f32 %v1649, %v1722
          %v1761 = vadd.f32 %v1649, %v1723
          %v1762 = vadd.f32 %v1654, %v1722
          %v1763 = vadd.f32 %v1654, %v1723
          %v1764 = vadd.f32 %v1659, %v1722
          %v1765 = vadd.f32 %v1659, %v1723
          %v1766 = vadd.f32 %v1664, %v1722
          %v1767 = vadd.f32 %v1664, %v1723
          %v1768 = vadd.f32 %v1669, %v1722
          %v1769 = vadd.f32 %v1669, %v1723
          %v1770 = vadd.f32 %v1674, %v1722
          %v1771 = vadd.f32 %v1674, %v1723
          %v1772 = vadd.f32 %v1679, %v1722
          %v1773 = vadd.f32 %v1679, %v1723
          %v1774 = vadd.f32 %v1684, %v1722
          %v1775 = vadd.f32 %v1684, %v1723
          %v1776 = vadd.f32 %v1689, %v1722
          %v1777 = vadd.f32 %v1689, %v1723
          %v1778 = vadd.f32 %v1694, %v1722
          %v1779 = vadd.f32 %v1694, %v1723
          %v1780 = vadd.f32 %v1699, %v1722
          %v1781 = vadd.f32 %v1699, %v1723
          %v1782 = vadd.f32 %v1704, %v1722
          %v1783 = vadd.f32 %v1704, %v1723
          %v1784 = vadd.f32 %v1709, %v1722
          %v1785 = vadd.f32 %v1709, %v1723
          %v1786 = vadd.f32 %v1714, %v1722
          %v1787 = vadd.f32 %v1714, %v1723
          %v1788 = vadd.f32 %v1719, %v1722
          %v1789 = vadd.f32 %v1719, %v1723
          %v1790 = vmul.f32 %v1465, %v1726
          %v1791 = vmul.f32 %v1466, %v1727
          %v1792 = vmul.f32 %v1467, %v1728
          %v1793 = vmul.f32 %v1468, %v1729
          %v1794 = vmul.f32 %v1469, %v1730
          %v1795 = vmul.f32 %v1470, %v1731
          %v1796 = vmul.f32 %v1471, %v1732
          %v1797 = vmul.f32 %v1472, %v1733
          %v1798 = vmul.f32 %v1473, %v1734
          %v1799 = vmul.f32 %v1474, %v1735
          %v1800 = vmul.f32 %v1475, %v1736
          %v1801 = vmul.f32 %v1476, %v1737
          %v1802 = vmul.f32 %v1477, %v1738
          %v1803 = vmul.f32 %v1478, %v1739
          %v1804 = vmul.f32 %v1479, %v1740
          %v1805 = vmul.f32 %v1480, %v1741
          %v1806 = vmul.f32 %v1481, %v1742
          %v1807 = vmul.f32 %v1482, %v1743
          %v1808 = vmul.f32 %v1483, %v1744
          %v1809 = vmul.f32 %v1484, %v1745
          %v1810 = vmul.f32 %v1485, %v1746
          %v1811 = vmul.f32 %v1486, %v1747
          %v1812 = vmul.f32 %v1487, %v1748
          %v1813 = vmul.f32 %v1488, %v1749
          %v1814 = vmul.f32 %v1489, %v1750
          %v1815 = vmul.f32 %v1490, %v1751
          %v1816 = vmul.f32 %v1491, %v1752
          %v1817 = vmul.f32 %v1492, %v1753
          %v1818 = vmul.f32 %v1493, %v1754
          %v1819 = vmul.f32 %v1494, %v1755
          %v1820 = vmul.f32 %v1495, %v1756
          %v1821 = vmul.f32 %v1496, %v1757
          %v1822 = vmul.f32 %v1497, %v1758
          %v1823 = vmul.f32 %v1498, %v1759
          %v1824 = vmul.f32 %v1499, %v1760
          %v1825 = vmul.f32 %v1500, %v1761
          %v1826 = vmul.f32 %v1501, %v1762
          %v1827 = vmul.f32 %v1502, %v1763
          %v1828 = vmul.f32 %v1503, %v1764
          %v1829 = vmul.f32 %v1504, %v1765
          %v1830 = vmul.f32 %v1505, %v1766
          %v1831 = vmul.f32 %v1506, %v1767
          %v1832 = vmul.f32 %v1507, %v1768
          %v1833 = vmul.f32 %v1508, %v1769
          %v1834 = vmul.f32 %v1509, %v1770
          %v1835 = vmul.f32 %v1510, %v1771
          %v1836 = vmul.f32 %v1511, %v1772
          %v1837 = vmul.f32 %v1512, %v1773
          %v1838 = vmul.f32 %v1513, %v1774
          %v1839 = vmul.f32 %v1514, %v1775
          %v1840 = vmul.f32 %v1515, %v1776
          %v1841 = vmul.f32 %v1516, %v1777
          %v1842 = vmul.f32 %v1517, %v1778
          %v1843 = vmul.f32 %v1518, %v1779
          %v1844 = vmul.f32 %v1519, %v1780
          %v1845 = vmul.f32 %v1520, %v1781
          %v1846 = vmul.f32 %v1521, %v1782
          %v1847 = vmul.f32 %v1522, %v1783
          %v1848 = vmul.f32 %v1523, %v1784
          %v1849 = vmul.f32 %v1524, %v1785
          %v1850 = vmul.f32 %v1525, %v1786
          %v1851 = vmul.f32 %v1526, %v1787
          %v1852 = vmul.f32 %v1527, %v1788
          %v1853 = vmul.f32 %v1528, %v1789
          %v1854 = vadd.f32 %v1401, %v1790
          %v1855 = vadd.f32 %v1402, %v1791
          %v1856 = vadd.f32 %v1403, %v1792
          %v1857 = vadd.f32 %v1404, %v1793
          %v1858 = vadd.f32 %v1405, %v1794
          %v1859 = vadd.f32 %v1406, %v1795
          %v1860 = vadd.f32 %v1407, %v1796
          %v1861 = vadd.f32 %v1408, %v1797
          %v1862 = vadd.f32 %v1409, %v1798
          %v1863 = vadd.f32 %v1410, %v1799
          %v1864 = vadd.f32 %v1411, %v1800
          %v1865 = vadd.f32 %v1412, %v1801
          %v1866 = vadd.f32 %v1413, %v1802
          %v1867 = vadd.f32 %v1414, %v1803
          %v1868 = vadd.f32 %v1415, %v1804
          %v1869 = vadd.f32 %v1416, %v1805
          %v1870 = vadd.f32 %v1417, %v1806
          %v1871 = vadd.f32 %v1418, %v1807
          %v1872 = vadd.f32 %v1419, %v1808
          %v1873 = vadd.f32 %v1420, %v1809
          %v1874 = vadd.f32 %v1421, %v1810
          %v1875 = vadd.f32 %v1422, %v1811
          %v1876 = vadd.f32 %v1423, %v1812
          %v1877 = vadd.f32 %v1424, %v1813
          %v1878 = vadd.f32 %v1425, %v1814
          %v1879 = vadd.f32 %v1426, %v1815
          %v1880 = vadd.f32 %v1427, %v1816
          %v1881 = vadd.f32 %v1428, %v1817
          %v1882 = vadd.f32 %v1429, %v1818
          %v1883 = vadd.f32 %v1430, %v1819
          %v1884 = vadd.f32 %v1431, %v1820
          %v1885 = vadd.f32 %v1432, %v1821
          %v1886 = vadd.f32 %v1433, %v1822
          %v1887 = vadd.f32 %v1434, %v1823
          %v1888 = vadd.f32 %v1435, %v1824
          %v1889 = vadd.f32 %v1436, %v1825
          %v1890 = vadd.f32 %v1437, %v1826
          %v1891 = vadd.f32 %v1438, %v1827
          %v1892 = vadd.f32 %v1439, %v1828
          %v1893 = vadd.f32 %v1440, %v1829
          %v1894 = vadd.f32 %v1441, %v1830
          %v1895 = vadd.f32 %v1442, %v1831
          %v1896 = vadd.f32 %v1443, %v1832
          %v1897 = vadd.f32 %v1444, %v1833
          %v1898 = vadd.f32 %v1445, %v1834
          %v1899 = vadd.f32 %v1446, %v1835
          %v1900 = vadd.f32 %v1447, %v1836
          %v1901 = vadd.f32 %v1448, %v1837
          %v1902 = vadd.f32 %v1449, %v1838
          %v1903 = vadd.f32 %v1450, %v1839
          %v1904 = vadd.f32 %v1451, %v1840
          %v1905 = vadd.f32 %v1452, %v1841
          %v1906 = vadd.f32 %v1453, %v1842
          %v1907 = vadd.f32 %v1454, %v1843
          %v1908 = vadd.f32 %v1455, %v1844
          %v1909 = vadd.f32 %v1456, %v1845
          %v1910 = vadd.f32 %v1457, %v1846
          %v1911 = vadd.f32 %v1458, %v1847
          %v1912 = vadd.f32 %v1459, %v1848
          %v1913 = vadd.f32 %v1460, %v1849
          %v1914 = vadd.f32 %v1461, %v1850
          %v1915 = vadd.f32 %v1462, %v1851
          %v1916 = vadd.f32 %v1463, %v1852
          %v1917 = vadd.f32 %v1464, %v1853
          %1918 = vst [vmem:[%s377] sm:$0xff] %v1854
          %1919 = vst [vmem:[%s377 + $0x8] sm:$0xff] %v1855
          %1920 = vst [vmem:[%s377 + $0x10] sm:$0xff] %v1856
          %1921 = vst [vmem:[%s377 + $0x18] sm:$0xff] %v1857
          %1922 = vst [vmem:[%s377 + $0x20] sm:$0xff] %v1858
          %1923 = vst [vmem:[%s377 + $0x28] sm:$0xff] %v1859
          %1924 = vst [vmem:[%s377 + $0x30] sm:$0xff] %v1860
          %1925 = vst [vmem:[%s377 + $0x38] sm:$0xff] %v1861
          %1926 = vst [vmem:[%s377 + $0x40] sm:$0xff] %v1862
          %1927 = vst [vmem:[%s377 + $0x48] sm:$0xff] %v1863
          %1928 = vst [vmem:[%s377 + $0x50] sm:$0xff] %v1864
          %1929 = vst [vmem:[%s377 + $0x58] sm:$0xff] %v1865
          %1930 = vst [vmem:[%s377 + $0x60] sm:$0xff] %v1866
          %1931 = vst [vmem:[%s377 + $0x68] sm:$0xff] %v1867
          %1932 = vst [vmem:[%s377 + $0x70] sm:$0xff] %v1868
          %1933 = vst [vmem:[%s377 + $0x78] sm:$0xff] %v1869
          %1934 = vst [vmem:[%s377 + $0x80] sm:$0xff] %v1870
          %1935 = vst [vmem:[%s377 + $0x88] sm:$0xff] %v1871
          %1936 = vst [vmem:[%s377 + $0x90] sm:$0xff] %v1872
          %1937 = vst [vmem:[%s377 + $0x98] sm:$0xff] %v1873
          %1938 = vst [vmem:[%s377 + $0xa0] sm:$0xff] %v1874
          %1939 = vst [vmem:[%s377 + $0xa8] sm:$0xff] %v1875
          %1940 = vst [vmem:[%s377 + $0xb0] sm:$0xff] %v1876
          %1941 = vst [vmem:[%s377 + $0xb8] sm:$0xff] %v1877
          %1942 = vst [vmem:[%s377 + $0xc0] sm:$0xff] %v1878
          %1943 = vst [vmem:[%s377 + $0xc8] sm:$0xff] %v1879
          %1944 = vst [vmem:[%s377 + $0xd0] sm:$0xff] %v1880
          %1945 = vst [vmem:[%s377 + $0xd8] sm:$0xff] %v1881
          %1946 = vst [vmem:[%s377 + $0xe0] sm:$0xff] %v1882
          %1947 = vst [vmem:[%s377 + $0xe8] sm:$0xff] %v1883
          %1948 = vst [vmem:[%s377 + $0xf0] sm:$0xff] %v1884
          %1949 = vst [vmem:[%s377 + $0xf8] sm:$0xff] %v1885
          %1950 = vst [vmem:[%s377 + $0x100] sm:$0xff] %v1886
          %1951 = vst [vmem:[%s377 + $0x108] sm:$0xff] %v1887
          %1952 = vst [vmem:[%s377 + $0x110] sm:$0xff] %v1888
          %1953 = vst [vmem:[%s377 + $0x118] sm:$0xff] %v1889
          %1954 = vst [vmem:[%s377 + $0x120] sm:$0xff] %v1890
          %1955 = vst [vmem:[%s377 + $0x128] sm:$0xff] %v1891
          %1956 = vst [vmem:[%s377 + $0x130] sm:$0xff] %v1892
          %1957 = vst [vmem:[%s377 + $0x138] sm:$0xff] %v1893
          %1958 = vst [vmem:[%s377 + $0x140] sm:$0xff] %v1894
          %1959 = vst [vmem:[%s377 + $0x148] sm:$0xff] %v1895
          %1960 = vst [vmem:[%s377 + $0x150] sm:$0xff] %v1896
          %1961 = vst [vmem:[%s377 + $0x158] sm:$0xff] %v1897
          %1962 = vst [vmem:[%s377 + $0x160] sm:$0xff] %v1898
          %1963 = vst [vmem:[%s377 + $0x168] sm:$0xff] %v1899
          %1964 = vst [vmem:[%s377 + $0x170] sm:$0xff] %v1900
          %1965 = vst [vmem:[%s377 + $0x178] sm:$0xff] %v1901
          %1966 = vst [vmem:[%s377 + $0x180] sm:$0xff] %v1902
          %1967 = vst [vmem:[%s377 + $0x188] sm:$0xff] %v1903
          %1968 = vst [vmem:[%s377 + $0x190] sm:$0xff] %v1904
          %1969 = vst [vmem:[%s377 + $0x198] sm:$0xff] %v1905
          %1970 = vst [vmem:[%s377 + $0x1a0] sm:$0xff] %v1906
          %1971 = vst [vmem:[%s377 + $0x1a8] sm:$0xff] %v1907
          %1972 = vst [vmem:[%s377 + $0x1b0] sm:$0xff] %v1908
          %1973 = vst [vmem:[%s377 + $0x1b8] sm:$0xff] %v1909
          %1974 = vst [vmem:[%s377 + $0x1c0] sm:$0xff] %v1910
          %1975 = vst [vmem:[%s377 + $0x1c8] sm:$0xff] %v1911
          %1976 = vst [vmem:[%s377 + $0x1d0] sm:$0xff] %v1912
          %1977 = vst [vmem:[%s377 + $0x1d8] sm:$0xff] %v1913
          %1978 = vst [vmem:[%s377 + $0x1e0] sm:$0xff] %v1914
          %1979 = vst [vmem:[%s377 + $0x1e8] sm:$0xff] %v1915
          %1980 = vst [vmem:[%s377 + $0x1f0] sm:$0xff] %v1916
          %1981 = vst [vmem:[%s377 + $0x1f8] sm:$0xff] %v1917
        $region60: #{tpu_custom_call.1} parent=39 // pred_fallthru
          _
        %s1982 = sand.u32 %s185, 1
        %s1983 = scalar_lea.sflag [#allocation4], %s1982
        %s1984 = sand.u32 %s185, 1
        %s1985 = smul.addr %s1984, 512
        %s1986 = scalar_lea.vmem [#allocation8], %s1985
        // Predicated region
        $region61: #{tpu_custom_call.1} parent=39 // pred_check
          %p1987 = pneg %p195
        $region62: #{tpu_custom_call.1} parent=39 // pred_check_branch
          %1989 = sbr.rel (%p1987) target = $region64
        $region63: #{tpu_custom_call.1} parent=39 // pred_region
          %s1990 = smul.u32 32, %s30
          %s1991 = smul.u32 2, %s31
          %1993 = vsyncadd %s1983, 0
          %s1994 = smul.addr %s1990, 4
          %s1995 = sadd.s32 %s1991, %s1994
          %s1996 = smul.addr %s1995, 8
          %s1997 = scalar_lea.hbm %s5, %s1996
          %s1998 = sshll.u32 %s1986, 4
          %s1999 = int_to_ptr.vmem [resolvable:$true] %s1998
          %s2000 = sshll.u32 %s1997, 4
          %s2001 = int_to_ptr.hbm [resolvable:$true] %s2000
          %2006 = dma.vmem_to_hbm [thread:$0]  %s1999, 8192, %s2001, %s1983, 256, 512, 16
        $region64: #{tpu_custom_call.1} parent=39 // pred_fallthru
          _
      $region40: #{tpu_custom_call.1} parent=5 // pred_fallthru
        _
      %p2007 = scmp.le.s32.totalorder 2, %s20
      // Predicated region
      $region65: #{tpu_custom_call.1} parent=5 // pred_check
        %p2008 = pneg %p2007
      $region66: #{tpu_custom_call.1} parent=5 // pred_check_branch
        %2010 = sbr.rel (%p2008) target = $region68
      $region67: #{tpu_custom_call.1} parent=5 // pred_region
        %s2011 = ssub.s32 %s20, 2
        // Predicated region
        $region69: #{tpu_custom_call.1} parent=67 // pred_check
          %p2012 = pneg %p201
        $region70: #{tpu_custom_call.1} parent=67 // pred_check_branch
          %2014 = sbr.rel (%p2012) target = $region72
        $region71: #{tpu_custom_call.1} parent=67 // pred_region
          %s2015 = sand.u32 %s186, 1
          %s2016 = scalar_lea.sflag [#allocation4], %s2015
          %s2017 = sand.u32 %s186, 1
          %s2018 = smul.addr %s2017, 512
          %s2019 = scalar_lea.vmem [#allocation8], %s2018
          %2021 = dma.done %s2016, 8192
        $region72: #{tpu_custom_call.1} parent=67 // pred_fallthru
          _
      $region68: #{tpu_custom_call.1} parent=5 // pred_fallthru
        _
    $region6: #{tpu_custom_call.1} parent=1 // loop_footer
      %s24 = sadd.s32 1, %s20
    $region7: #{tpu_custom_call.1} parent=1 // loop_footer_branch
      %19 = sbr.rel target = $region3
    $region8: #{tpu_custom_call.1} parent=1 // loop_exit
      _
    %2022 = vsyncpa [#allocation3], 1
    %s2023 = scalar_lea.sflag [#allocation3], 1
    %2024 = vsyncpa %s2023, 1
    %2025 = vsyncpa [#allocation6], 1
    %s2026 = scalar_lea.sflag [#allocation6], 1
    %2027 = vsyncpa %s2026, 1
    %2028 = vsyncpa [#allocation4], 1
    %s2029 = scalar_lea.sflag [#allocation4], 1
    %2030 = vsyncpa %s2029, 1

</llo_original>
